<compile_context>
chip_gen: v7x
topology: tpu7x:2x2x1
jax: 0.10.0
libtpu: 0.0.40
codegen_flags: <defaults>
</compile_context>

<pallas_src>
import jax
import jax.numpy as jnp
from jax import lax
from jax.experimental import pallas as pl
from jax.experimental.pallas import tpu as pltpu


def _round_up(x: int, m: int) -> int:
    return (x + m - 1) // m * m


def _gather_kernel(ids_ref, table_ref, out_ref):
    # ids_ref:   [TILE, 1]      int32 (ids already clamped to valid range)
    # table_ref: [P_pad, E_pad]  full padded embedding table, VMEM-resident
    # out_ref:   [TILE, E_pad]
    ids = ids_ref[...]                                    # [TILE, 1]
    tile = ids.shape[0]
    p_pad = table_ref.shape[0]
    # Exact one-hot (0/1 in table dtype) -> MXU matmul gather.
    onehot = (ids == lax.broadcasted_iota(jnp.int32, (tile, p_pad), 1)
              ).astype(table_ref.dtype)                   # [TILE, P_pad]
    out_ref[...] = jnp.dot(
        onehot, table_ref[...],
        preferred_element_type=jnp.float32,
        precision=lax.Precision.HIGHEST,   # bf16x3 passes -> bit-exact f32 gather
    ).astype(out_ref.dtype)


def soft_prompt_embedding(prompt_ids, embedding_table, *,
                          max_tile: int = 2048,
                          out_vmem_budget: int = 24 << 20):
    """prompt_ids: int [...], embedding_table: f32 [num_prompts, E].

    Returns [..., E] = embedding_table[prompt_ids] (nn.Embedding semantics).
    """
    orig_shape = prompt_ids.shape
    flat_ids = prompt_ids.reshape(-1).astype(jnp.int32)
    n_tokens = int(flat_ids.shape[0])
    num_prompts, emb = embedding_table.shape

    # Clamp ids to the valid range: nn.Embedding would raise on out-of-range
    # ids; there is no in-kernel bounds check on TPU, so guard here (documented
    # semantic difference: out-of-range ids map to the nearest valid row).
    flat_ids = jnp.clip(flat_ids, 0, num_prompts - 1)

    # Lane-dense output / table: pad E to a multiple of 128.
    emb_pad = _round_up(emb, 128)
    # Pad table rows to a multiple of 128 (MXU-friendly one-hot contraction);
    # padded rows are zero and never selected by valid (clamped) ids.
    p_pad = _round_up(max(num_prompts, 128), 128)

    # --- Tile selection: biggest tile that fits the VMEM budget, >=2 grid
    # steps when possible (v7x megacore), minimal padded tail. ---
    n8 = _round_up(max(n_tokens, 1), 8)
    budget_tile = max(8, (out_vmem_budget // (2 * emb_pad * 4)) // 8 * 8)
    cap = max(8, min(max_tile, budget_tile))
    min_steps = 2 if n8 >= 16 else 1
    n_steps = max(pl.cdiv(n8, cap), min_steps)
    tok_tile = _round_up(pl.cdiv(n8, n_steps), 8)    # <= cap, multiple of 8
    n_pad = n_steps * tok_tile                       # padding <= 8*n_steps - 1 rows

    ids_2d = jnp.pad(flat_ids, (0, n_pad - n_tokens)).reshape(n_pad, 1)
    table_padded = jnp.pad(
        embedding_table, ((0, p_pad - num_prompts), (0, emb_pad - emb)))

    # VMEM accounting: double-buffered output + ids, single-buffered table,
    # plus the one-hot intermediate; add headroom and cap below v7x physical.
    out_bytes = 2 * tok_tile * emb_pad * 4
    ids_bytes = 2 * tok_tile * 128 * 4            # (TILE,1) block is lane-padded
    table_bytes = p_pad * emb_pad * 4             # Buffered(1)
    onehot_bytes = tok_tile * p_pad * 4
    vmem_limit = min(
        56 << 20,
        _round_up(out_bytes + ids_bytes + table_bytes + onehot_bytes, 1 << 20)
        + (4 << 20))

    cost = pl.CostEstimate(
        flops=2 * n_pad * p_pad * emb_pad,
        transcendentals=0,
        bytes_accessed=n_pad * emb_pad * 4 + p_pad * emb_pad * 4 + n_pad * 4,
    )

    out_flat = pl.pallas_call(
        _gather_kernel,
        out_shape=jax.ShapeDtypeStruct((n_pad, emb_pad), embedding_table.dtype),
        grid=(n_steps,),
        in_specs=[
            # ids tile for this grid step
            pl.BlockSpec((tok_tile, 1), lambda i: (i, 0)),
            # full padded table, resident every step; single-buffered since the
            # constant index_map means it is never re-fetched
            pl.BlockSpec((p_pad, emb_pad), lambda i: (0, 0),
                         pipeline_mode=pl.Buffered(1)),
        ],
        out_specs=pl.BlockSpec((tok_tile, emb_pad), lambda i: (i, 0)),
        compiler_params=pltpu.CompilerParams(
            dimension_semantics=("parallel",),
            vmem_limit_bytes=int(vmem_limit),
        ),
        cost_estimate=cost,
    )(ids_2d, table_padded)

    return out_flat[:n_tokens, :emb].reshape(*orig_shape, emb)


if __name__ == "__main__":
    # Small, module-consistent shapes.
    num_prompts = 10
    embedding_size = 768
    batch, seq = 2, 8

    key = jax.random.PRNGKey(0)
    k_table, k_ids = jax.random.split(key)

    # nn.Embedding default init: N(0, 1).
    embedding_table = jax.random.normal(
        k_table, (num_prompts, embedding_size), dtype=jnp.float32
    )
    prompt_ids = jax.random.randint(
        k_ids, (batch, seq), minval=0, maxval=num_prompts, dtype=jnp.int32
    )

    out = soft_prompt_embedding(prompt_ids, embedding_table)
    out = jax.block_until_ready(out)

    # Cross-check against plain-JAX reference gather — exact equality, since
    # the pinned-precision one-hot matmul is a bit-exact copy-gather.
    ref = jnp.take(embedding_table, prompt_ids, axis=0)
    assert out.shape == (batch, seq, embedding_size)
    assert out.dtype == jnp.float32
    assert bool(jnp.array_equal(out, ref)), "Pallas gather mismatch vs reference"

    print("KERNEL_OK")
</pallas_src>

<mosaic_0001>
module attributes {stable_mosaic.version = 11 : i64} {
  func.func @_gather_kernel(%arg0: i32, %arg1: memref<8x1xi32, #tpu.memory_space<vmem>>, %arg2: memref<128x768xf32, #tpu.memory_space<vmem>>, %arg3: memref<8x768xf32, #tpu.memory_space<vmem>>) attributes {dimension_semantics = [#tpu.dimension_semantics<parallel>], iteration_bounds = array<i64: 2>, scalar_prefetch = 0 : i64, scratch_operands = 0 : i64, tpu.core_type = #tpu.core_type<tc>, window_params = [{transform_indices = @transform_0, window_bounds = array<i64: 8, 1>}, {pipeline_mode = #tpu.pipeline_mode<synchronous>, transform_indices = @transform_1, window_bounds = array<i64: 128, 768>}, {transform_indices = @transform_2, window_bounds = array<i64: 8, 768>}]} {
    %c0 = arith.constant 0 : index
    %c0_0 = arith.constant 0 : index
    %0 = vector.load %arg1[%c0, %c0_0] : memref<8x1xi32, #tpu.memory_space<vmem>>, vector<8x1xi32>
    %1 = tpu.iota {dimensions = array<i32: 1>} : vector<8x128xi32>
    %2 = vector.broadcast %0 : vector<8x1xi32> to vector<8x128xi32>
    %3 = arith.cmpi eq, %2, %1 : vector<8x128xi32>
    %4 = arith.extui %3 : vector<8x128xi1> to vector<8x128xi32>
    %5 = arith.sitofp %4 : vector<8x128xi32> to vector<8x128xf32>
    %c0_1 = arith.constant 0 : index
    %c0_2 = arith.constant 0 : index
    %6 = vector.load %arg2[%c0_1, %c0_2] : memref<128x768xf32, #tpu.memory_space<vmem>>, vector<128x768xf32>
    %cst = arith.constant dense<0.000000e+00> : vector<8x768xf32>
    %7 = tpu.matmul %5, %6, %cst {dimension_numbers = #tpu.dot_dimension_numbers<[1], [0], [0], [1], [0, 0, 1, 1], [], []>, precision = #tpu.contract_precision<fp32>} : vector<8x128xf32>, vector<128x768xf32>, vector<8x768xf32> -> vector<8x768xf32>
    %c0_3 = arith.constant 0 : index
    %c0_4 = arith.constant 0 : index
    %8 = vector.load %arg3[%c0_3, %c0_4] : memref<8x768xf32, #tpu.memory_space<vmem>>, vector<8x768xf32>
    tpu.vector_store %arg3[%c0_3, %c0_4], %7 {strides = array<i32>} : memref<8x768xf32, #tpu.memory_space<vmem>>, vector<8x768xf32>,
    return
  }
  func.func @transform_0(%arg0: i32) -> (i32, i32) {
    %c0_i32 = arith.constant 0 : i32
    %c0_i32_0 = arith.constant 0 : i32
    return %arg0, %c0_i32 : i32, i32
  }
  func.func @transform_1(%arg0: i32) -> (i32, i32) {
    %c0_i32 = arith.constant 0 : i32
    %c0_i32_0 = arith.constant 0 : i32
    %c0_i32_1 = arith.constant 0 : i32
    return %c0_i32, %c0_i32_0 : i32, i32
  }
  func.func @transform_2(%arg0: i32) -> (i32, i32) {
    %c0_i32 = arith.constant 0 : i32
    %c0_i32_0 = arith.constant 0 : i32
    return %arg0, %c0_i32 : i32, i32
  }
}

</mosaic_0001>

<llo_original>
// kernel: tpu_custom_call.1
$region0: #{tpu_custom_call.1}
  #allocation0 [shape = 'u32[]', space=smem, size = 0x4, offset = 0x4, fixed_abs, tag = 'smem constant byte address 0x4 - core index']
  #allocation1 [shape = 'u32[144,128]{1,0:T(1,128)}', space=vmem, size = 0x12000, scoped, tag = 'internal scratch']
  %s0 = inlined_call_operand.vmem [shape: s32[16,1], index: 0, kind: input, shape index: {}]
  %s1 = inlined_call_operand.hbm [shape: f32[128,768], index: 1, kind: input, shape index: {}]
  %s2 = inlined_call_operand.hbm [shape: f32[16,768], index: 2, kind: output, shape index: {}]
  %s3 = sld [smem:[#allocation0]]
  $region45: #{tpu_custom_call.1} parent=0
    _
  %s5 = ssub.s32 1, %s3
  %s6 = scalar_select 0, %s5, %s3
  $region1: #{tpu_custom_call.1} parent=0
    #allocation2 [shape = 'u8[393216]{0}', space=vmem, size = 0x60000, scoped, tag = 'input window, operand 1, single buffered']
    #allocation3 [shape = 's32[2]{0}', space=sflag, size = 0x8, scoped, tag = 'scoped memory for tpu_custom_call.1']
    #allocation4 [shape = 's32[2]{0}', space=sflag, size = 0x8, scoped, tag = 'scoped memory for tpu_custom_call.1']
    #allocation5 [shape = 'u8[49152]{0}', space=vmem, size = 0xc000, scoped, tag = 'output window, operand 0']
    %7 = vsyncpa [#allocation3], 0
    %8 = vsyncpa [#allocation4], 0
    %s9 = scalar_lea.sflag [#allocation4], 1
    %10 = vsyncpa %s9, 0
    loop: start=0, step=1, limit=4
    $region2: #{tpu_custom_call.1} parent=1 // loop_pre_header
      _
    $region3: #{tpu_custom_call.1} parent=1 // loop_header
      %s12 = sphi 0, %s16
      %p13 = scmp.ge.s32.totalorder %s12, 4
      %s22 = sphi 0, %s24
      %s25 = sphi 0, %s22
      %s26 = sphi 0, %s25
      %s42 = sphi 0, %s26
      %s46 = sphi 0, %s46
      %s48 = sphi 0, %s46
      %s49 = sphi 0, %s48
      %s63 = sphi 0, %s49
      %s69 = sphi 0, %s71
      %s72 = sphi 0, %s69
      %s73 = sphi 0, %s72
      %s89 = sphi 0, %s73
    $region4: #{tpu_custom_call.1} parent=1 // loop_header_branch
      %15 = sbr.rel (%p13) target = $region8
    $region5: #{tpu_custom_call.1} parent=1 // loop_body
      %s17 = ssub.s32 %s12, 1
      %s18 = ssub.s32 %s12, 2
      %s19 = sadd.s32 %s12, 1
      %s20 = ssub.s32 %s12, %s19
      %p21 = scmp.eq.s32.totalorder %s20, 0
      %s23 = sadd.s32 %s22, 1
      %s24 = scalar_select %p21, %s22, %s23
      %p27 = pneg %p21
      %p28 = scmp.eq.s32.totalorder %s12, 1
      %p29 = por %p27, %p28
      %p30 = scmp.ne.s32.totalorder %s22, %s25
      %p31 = scmp.eq.s32.totalorder %s12, 0
      %p32 = por %p30, %p31
      %p33 = scmp.ne.s32.totalorder %s22, %s25
      %p34 = scmp.eq.s32.totalorder %s17, 1
      %p35 = por %p33, %p34
      %p36 = scmp.ne.s32.totalorder %s25, %s26
      %p37 = scmp.eq.s32.totalorder %s17, 0
      %p38 = por %p36, %p37
      %p39 = scmp.ne.s32.totalorder %s25, %s26
      %p40 = scmp.eq.s32.totalorder %s18, 1
      %p41 = por %p39, %p40
      %p43 = scmp.ne.s32.totalorder %s26, %s42
      %p44 = scmp.eq.s32.totalorder %s18, 0
      %p45 = por %p43, %p44
      %s47 = sadd.s32 %s46, 1
      %p50 = scmp.eq.s32.totalorder %s12, 1
      %p51 = scmp.ne.s32.totalorder %s46, %s48
      %p52 = scmp.eq.s32.totalorder %s12, 0
      %p53 = por %p51, %p52
      %p54 = scmp.ne.s32.totalorder %s46, %s48
      %p55 = scmp.eq.s32.totalorder %s17, 1
      %p56 = por %p54, %p55
      %p57 = scmp.ne.s32.totalorder %s48, %s49
      %p58 = scmp.eq.s32.totalorder %s17, 0
      %p59 = por %p57, %p58
      %p60 = scmp.ne.s32.totalorder %s48, %s49
      %p61 = scmp.eq.s32.totalorder %s18, 1
      %p62 = por %p60, %p61
      %p64 = scmp.ne.s32.totalorder %s49, %s63
      %p65 = scmp.eq.s32.totalorder %s18, 0
      %p66 = por %p64, %p65
      %s67 = ssub.s32 %s12, %s19
      %p68 = scmp.eq.s32.totalorder %s67, 0
      %s70 = sadd.s32 %s69, 1
      %s71 = scalar_select %p68, %s69, %s70
      %p74 = pneg %p68
      %p75 = scmp.eq.s32.totalorder %s12, 1
      %p76 = por %p74, %p75
      %p77 = scmp.ne.s32.totalorder %s69, %s72
      %p78 = scmp.eq.s32.totalorder %s12, 0
      %p79 = por %p77, %p78
      %p80 = scmp.ne.s32.totalorder %s69, %s72
      %p81 = scmp.eq.s32.totalorder %s17, 1
      %p82 = por %p80, %p81
      %p83 = scmp.ne.s32.totalorder %s72, %s73
      %p84 = scmp.eq.s32.totalorder %s17, 0
      %p85 = por %p83, %p84
      %p86 = scmp.ne.s32.totalorder %s72, %s73
      %p87 = scmp.eq.s32.totalorder %s18, 1
      %p88 = por %p86, %p87
      %p90 = scmp.ne.s32.totalorder %s73, %s89
      %p91 = scmp.eq.s32.totalorder %s18, 0
      %p92 = por %p90, %p91
      %p93 = scmp.le.s32.totalorder 1, %s12
      %p94 = scmp.lt.s32.totalorder %s12, 3
      %p95 = pnand %p93, %p94
      %p96 = pneg %p95
      // Predicated region
      $region9: #{tpu_custom_call.1} parent=5 // pred_check
        _
      $region10: #{tpu_custom_call.1} parent=5 // pred_check_branch
        %98 = sbr.rel (%p95) target = $region12
      $region11: #{tpu_custom_call.1} parent=5 // pred_region
        %s99 = ssub.s32 %s12, 1
        // Predicated region
        $region13: #{tpu_custom_call.1} parent=11 // pred_check
          %p100 = pneg %p59
        $region14: #{tpu_custom_call.1} parent=11 // pred_check_branch
          %102 = sbr.rel (%p100) target = $region16
        $region15: #{tpu_custom_call.1} parent=11 // pred_region
          %s104 = ssub.s32 12288, 12288
          %105 = vsyncadd [#allocation3], %s104
          %s106 = sshll.u32 [#allocation2], 4
          %s107 = int_to_ptr.vmem [resolvable:$true] %s106
          %112 = dma.hbm_to_vmem [thread:$0]  %s1, 12288, %s107, [#allocation3], 768, 768, 48
        $region16: #{tpu_custom_call.1} parent=11 // pred_fallthru
          _
      $region12: #{tpu_custom_call.1} parent=5 // pred_fallthru
        _
      %p113 = scmp.lt.s32.totalorder %s12, 2
      // Predicated region
      $region17: #{tpu_custom_call.1} parent=5 // pred_check
        %p114 = pneg %p113
      $region18: #{tpu_custom_call.1} parent=5 // pred_check_branch
        %116 = sbr.rel (%p114) target = $region20
      $region19: #{tpu_custom_call.1} parent=5 // pred_region
        // Predicated region
        $region21: #{tpu_custom_call.1} parent=19 // pred_check
          %p117 = pneg %p32
        $region22: #{tpu_custom_call.1} parent=19 // pred_check_branch
          %119 = sbr.rel (%p117) target = $region24
        $region23: #{tpu_custom_call.1} parent=19 // pred_region
          %p120 = scmp.lt.s32.totalorder %s12, 1
          %s121 = scalar_select %p120, %s12, 1
          %s122 = smul.addr %s121, 8
          %s123 = scalar_lea.vmem %s0, %s122
        $region24: #{tpu_custom_call.1} parent=19 // pred_fallthru
          _
      $region20: #{tpu_custom_call.1} parent=5 // pred_fallthru
        _
      %p124 = scmp.le.s32.totalorder 1, %s12
      %p125 = scmp.lt.s32.totalorder %s12, 3
      %p126 = pnand %p124, %p125
      %p127 = pneg %p126
      // Predicated region
      $region25: #{tpu_custom_call.1} parent=5 // pred_check
        _
      $region26: #{tpu_custom_call.1} parent=5 // pred_check_branch
        %129 = sbr.rel (%p126) target = $region28
      $region27: #{tpu_custom_call.1} parent=5 // pred_region
        %s130 = ssub.s32 %s12, 1
        // Predicated region
        $region29: #{tpu_custom_call.1} parent=27 // pred_check
          %p131 = pneg %p59
        $region30: #{tpu_custom_call.1} parent=27 // pred_check_branch
          %133 = sbr.rel (%p131) target = $region32
        $region31: #{tpu_custom_call.1} parent=27 // pred_region
          %134 = dma.done [#allocation3], 12288
        $region32: #{tpu_custom_call.1} parent=27 // pred_fallthru
          _
        %p135 = scmp.lt.s32.totalorder %s17, 1
        %s136 = scalar_select %p135, %s17, 1
        %s137 = smul.addr %s136, 8
        %s138 = scalar_lea.vmem %s0, %s137
        %p139 = pneg %p38
        %p140 = pneg %p35
        %p141 = pneg %p59
        %p142 = pneg %p56
        %p143 = pneg %p85
        %p144 = pneg %p82
        %s145 = sand.u32 %s72, 1
        %s146 = scalar_lea.sflag [#allocation4], %s145
        %s147 = sand.u32 %s72, 1
        %s148 = smul.addr %s147, 48
        %s149 = scalar_lea.vmem [#allocation5], %s148
        %p150 = scmp.lt.s32.totalorder %s17, 1
        %s151 = scalar_select %p150, %s17, 1
        %s152 = smul.addr %s151, 8
        %s153 = scalar_lea.vmem %s0, %s152
        %v154 = vld [vmem:[%s153] sm:$0xff]
        %v155 = vlaneseq
        %v156 = vand.u32 %v155, 127
        %157 = vset.pattern.permute.xlu0 0
        %158 = vperm.xlu0 %157, %v154
        %v159 = vpop.permute.xlu0 %158
        %vm160 = vcmp.eq.s32.totalorder %v159, %v156
        %v161 = vsel %vm160, 1, 0
        %v162 = vcvt.s32.f32 %v161
        %v163 = vld [vmem:[#allocation2] sm:$0xff]
        %v164 = vld [vmem:[#allocation2 + $0x8] sm:$0xff]
        %v165 = vld [vmem:[#allocation2 + $0x10] sm:$0xff]
        %v166 = vld [vmem:[#allocation2 + $0x18] sm:$0xff]
        %v167 = vld [vmem:[#allocation2 + $0x20] sm:$0xff]
        %v168 = vld [vmem:[#allocation2 + $0x28] sm:$0xff]
        %v169 = vld [vmem:[#allocation2 + $0x30] sm:$0xff]
        %v170 = vld [vmem:[#allocation2 + $0x38] sm:$0xff]
        %v171 = vld [vmem:[#allocation2 + $0x40] sm:$0xff]
        %v172 = vld [vmem:[#allocation2 + $0x48] sm:$0xff]
        %v173 = vld [vmem:[#allocation2 + $0x50] sm:$0xff]
        %v174 = vld [vmem:[#allocation2 + $0x58] sm:$0xff]
        %v175 = vld [vmem:[#allocation2 + $0x60] sm:$0xff]
        %v176 = vld [vmem:[#allocation2 + $0x68] sm:$0xff]
        %v177 = vld [vmem:[#allocation2 + $0x70] sm:$0xff]
        %v178 = vld [vmem:[#allocation2 + $0x78] sm:$0xff]
        %v179 = vld [vmem:[#allocation2 + $0x80] sm:$0xff]
        %v180 = vld [vmem:[#allocation2 + $0x88] sm:$0xff]
        %v181 = vld [vmem:[#allocation2 + $0x90] sm:$0xff]
        %v182 = vld [vmem:[#allocation2 + $0x98] sm:$0xff]
        %v183 = vld [vmem:[#allocation2 + $0xa0] sm:$0xff]
        %v184 = vld [vmem:[#allocation2 + $0xa8] sm:$0xff]
        %v185 = vld [vmem:[#allocation2 + $0xb0] sm:$0xff]
        %v186 = vld [vmem:[#allocation2 + $0xb8] sm:$0xff]
        %v187 = vld [vmem:[#allocation2 + $0xc0] sm:$0xff]
        %v188 = vld [vmem:[#allocation2 + $0xc8] sm:$0xff]
        %v189 = vld [vmem:[#allocation2 + $0xd0] sm:$0xff]
        %v190 = vld [vmem:[#allocation2 + $0xd8] sm:$0xff]
        %v191 = vld [vmem:[#allocation2 + $0xe0] sm:$0xff]
        %v192 = vld [vmem:[#allocation2 + $0xe8] sm:$0xff]
        %v193 = vld [vmem:[#allocation2 + $0xf0] sm:$0xff]
        %v194 = vld [vmem:[#allocation2 + $0xf8] sm:$0xff]
        %v195 = vld [vmem:[#allocation2 + $0x100] sm:$0xff]
        %v196 = vld [vmem:[#allocation2 + $0x108] sm:$0xff]
        %v197 = vld [vmem:[#allocation2 + $0x110] sm:$0xff]
        %v198 = vld [vmem:[#allocation2 + $0x118] sm:$0xff]
        %v199 = vld [vmem:[#allocation2 + $0x120] sm:$0xff]
        %v200 = vld [vmem:[#allocation2 + $0x128] sm:$0xff]
        %v201 = vld [vmem:[#allocation2 + $0x130] sm:$0xff]
        %v202 = vld [vmem:[#allocation2 + $0x138] sm:$0xff]
        %v203 = vld [vmem:[#allocation2 + $0x140] sm:$0xff]
        %v204 = vld [vmem:[#allocation2 + $0x148] sm:$0xff]
        %v205 = vld [vmem:[#allocation2 + $0x150] sm:$0xff]
        %v206 = vld [vmem:[#allocation2 + $0x158] sm:$0xff]
        %v207 = vld [vmem:[#allocation2 + $0x160] sm:$0xff]
        %v208 = vld [vmem:[#allocation2 + $0x168] sm:$0xff]
        %v209 = vld [vmem:[#allocation2 + $0x170] sm:$0xff]
        %v210 = vld [vmem:[#allocation2 + $0x178] sm:$0xff]
        %v211 = vld [vmem:[#allocation2 + $0x180] sm:$0xff]
        %v212 = vld [vmem:[#allocation2 + $0x188] sm:$0xff]
        %v213 = vld [vmem:[#allocation2 + $0x190] sm:$0xff]
        %v214 = vld [vmem:[#allocation2 + $0x198] sm:$0xff]
        %v215 = vld [vmem:[#allocation2 + $0x1a0] sm:$0xff]
        %v216 = vld [vmem:[#allocation2 + $0x1a8] sm:$0xff]
        %v217 = vld [vmem:[#allocation2 + $0x1b0] sm:$0xff]
        %v218 = vld [vmem:[#allocation2 + $0x1b8] sm:$0xff]
        %v219 = vld [vmem:[#allocation2 + $0x1c0] sm:$0xff]
        %v220 = vld [vmem:[#allocation2 + $0x1c8] sm:$0xff]
        %v221 = vld [vmem:[#allocation2 + $0x1d0] sm:$0xff]
        %v222 = vld [vmem:[#allocation2 + $0x1d8] sm:$0xff]
        %v223 = vld [vmem:[#allocation2 + $0x1e0] sm:$0xff]
        %v224 = vld [vmem:[#allocation2 + $0x1e8] sm:$0xff]
        %v225 = vld [vmem:[#allocation2 + $0x1f0] sm:$0xff]
        %v226 = vld [vmem:[#allocation2 + $0x1f8] sm:$0xff]
        %v227 = vld [vmem:[#allocation2 + $0x200] sm:$0xff]
        %v228 = vld [vmem:[#allocation2 + $0x208] sm:$0xff]
        %v229 = vld [vmem:[#allocation2 + $0x210] sm:$0xff]
        %v230 = vld [vmem:[#allocation2 + $0x218] sm:$0xff]
        %v231 = vld [vmem:[#allocation2 + $0x220] sm:$0xff]
        %v232 = vld [vmem:[#allocation2 + $0x228] sm:$0xff]
        %v233 = vld [vmem:[#allocation2 + $0x230] sm:$0xff]
        %v234 = vld [vmem:[#allocation2 + $0x238] sm:$0xff]
        %v235 = vld [vmem:[#allocation2 + $0x240] sm:$0xff]
        %v236 = vld [vmem:[#allocation2 + $0x248] sm:$0xff]
        %v237 = vld [vmem:[#allocation2 + $0x250] sm:$0xff]
        %v238 = vld [vmem:[#allocation2 + $0x258] sm:$0xff]
        %v239 = vld [vmem:[#allocation2 + $0x260] sm:$0xff]
        %v240 = vld [vmem:[#allocation2 + $0x268] sm:$0xff]
        %v241 = vld [vmem:[#allocation2 + $0x270] sm:$0xff]
        %v242 = vld [vmem:[#allocation2 + $0x278] sm:$0xff]
        %v243 = vld [vmem:[#allocation2 + $0x280] sm:$0xff]
        %v244 = vld [vmem:[#allocation2 + $0x288] sm:$0xff]
        %v245 = vld [vmem:[#allocation2 + $0x290] sm:$0xff]
        %v246 = vld [vmem:[#allocation2 + $0x298] sm:$0xff]
        %v247 = vld [vmem:[#allocation2 + $0x2a0] sm:$0xff]
        %v248 = vld [vmem:[#allocation2 + $0x2a8] sm:$0xff]
        %v249 = vld [vmem:[#allocation2 + $0x2b0] sm:$0xff]
        %v250 = vld [vmem:[#allocation2 + $0x2b8] sm:$0xff]
        %v251 = vld [vmem:[#allocation2 + $0x2c0] sm:$0xff]
        %v252 = vld [vmem:[#allocation2 + $0x2c8] sm:$0xff]
        %v253 = vld [vmem:[#allocation2 + $0x2d0] sm:$0xff]
        %v254 = vld [vmem:[#allocation2 + $0x2d8] sm:$0xff]
        %v255 = vld [vmem:[#allocation2 + $0x2e0] sm:$0xff]
        %v256 = vld [vmem:[#allocation2 + $0x2e8] sm:$0xff]
        %v257 = vld [vmem:[#allocation2 + $0x2f0] sm:$0xff]
        %v258 = vld [vmem:[#allocation2 + $0x2f8] sm:$0xff]
        %v259 = vand.u32 %v164, 4294901760
        %260 = vmatprep.subr.mxu0 %v259
        %v261 = vand.u32 %v163, 4294901760
        %262 = vmatpush1.msra.mxu0 %v261
        %v263 = vand.u32 %v170, 4294901760
        %264 = vmatprep.subr.mxu0 %v263
        %v265 = vand.u32 %v169, 4294901760
        %266 = vmatpush1.msra.mxu0 %v265
        %v267 = vand.u32 %v176, 4294901760
        %268 = vmatprep.subr.mxu0 %v267
        %v269 = vand.u32 %v175, 4294901760
        %270 = vmatpush1.msra.mxu0 %v269
        %v271 = vand.u32 %v182, 4294901760
        %272 = vmatprep.subr.mxu0 %v271
        %v273 = vand.u32 %v181, 4294901760
        %274 = vmatpush1.msra.mxu0 %v273
        %v275 = vand.u32 %v188, 4294901760
        %276 = vmatprep.subr.mxu0 %v275
        %v277 = vand.u32 %v187, 4294901760
        %278 = vmatpush1.msra.mxu0 %v277
        %v279 = vand.u32 %v194, 4294901760
        %280 = vmatprep.subr.mxu0 %v279
        %v281 = vand.u32 %v193, 4294901760
        %282 = vmatpush1.msra.mxu0 %v281
        %v283 = vand.u32 %v200, 4294901760
        %284 = vmatprep.subr.mxu0 %v283
        %v285 = vand.u32 %v199, 4294901760
        %286 = vmatpush1.msra.mxu0 %v285
        %v287 = vand.u32 %v206, 4294901760
        %288 = vmatprep.subr.mxu0 %v287
        %v289 = vand.u32 %v205, 4294901760
        %290 = vmatpush1.msra.mxu0 %v289
        %v291 = vand.u32 %v212, 4294901760
        %292 = vmatprep.subr.mxu0 %v291
        %v293 = vand.u32 %v211, 4294901760
        %294 = vmatpush1.msra.mxu0 %v293
        %v295 = vand.u32 %v218, 4294901760
        %296 = vmatprep.subr.mxu0 %v295
        %v297 = vand.u32 %v217, 4294901760
        %298 = vmatpush1.msra.mxu0 %v297
        %v299 = vand.u32 %v224, 4294901760
        %300 = vmatprep.subr.mxu0 %v299
        %v301 = vand.u32 %v223, 4294901760
        %302 = vmatpush1.msra.mxu0 %v301
        %v303 = vand.u32 %v230, 4294901760
        %304 = vmatprep.subr.mxu0 %v303
        %v305 = vand.u32 %v229, 4294901760
        %306 = vmatpush1.msra.mxu0 %v305
        %v307 = vand.u32 %v236, 4294901760
        %308 = vmatprep.subr.mxu0 %v307
        %v309 = vand.u32 %v235, 4294901760
        %310 = vmatpush1.msra.mxu0 %v309
        %v311 = vand.u32 %v242, 4294901760
        %312 = vmatprep.subr.mxu0 %v311
        %v313 = vand.u32 %v241, 4294901760
        %314 = vmatpush1.msra.mxu0 %v313
        %v315 = vand.u32 %v248, 4294901760
        %316 = vmatprep.subr.mxu0 %v315
        %v317 = vand.u32 %v247, 4294901760
        %318 = vmatpush1.msra.mxu0 %v317
        %v319 = vand.u32 %v254, 4294901760
        %320 = vmatprep.subr.mxu0 %v319
        %v321 = vand.u32 %v253, 4294901760
        %322 = vmatpush1.msra.mxu0 %v321
        %323 = vmatprep.subr.mxu0 0.0
        %324 = vmatpush1.msra.mxu0 0.0
        %325 = vmatprep.subr.mxu0 0.0
        %326 = vmatpush1.msra.mxu0 0.0
        %327 = vmatprep.subr.mxu0 0.0
        %328 = vmatpush1.msra.mxu0 0.0
        %329 = vmatprep.subr.mxu0 0.0
        %330 = vmatpush1.msra.mxu0 0.0
        %331 = vmatprep.subr.mxu0 0.0
        %332 = vmatpush1.msra.mxu0 0.0
        %333 = vmatprep.subr.mxu0 0.0
        %334 = vmatpush1.msra.mxu0 0.0
        %335 = vmatprep.subr.mxu0 0.0
        %336 = vmatpush1.msra.mxu0 0.0
        %337 = vmatprep.subr.mxu0 0.0
        %338 = vmatpush1.msra.mxu0 0.0
        %339 = vmatprep.subr.mxu0 0.0
        %340 = vmatpush1.msra.mxu0 0.0
        %341 = vmatprep.subr.mxu0 0.0
        %342 = vmatpush1.msra.mxu0 0.0
        %343 = vmatprep.subr.mxu0 0.0
        %344 = vmatpush1.msra.mxu0 0.0
        %345 = vmatprep.subr.mxu0 0.0
        %346 = vmatpush1.msra.mxu0 0.0
        %347 = vmatprep.subr.mxu0 0.0
        %348 = vmatpush1.msra.mxu0 0.0
        %349 = vmatprep.subr.mxu0 0.0
        %350 = vmatpush1.msra.mxu0 0.0
        %351 = vmatprep.subr.mxu0 0.0
        %352 = vmatpush1.msra.mxu0 0.0
        %353 = vmatprep.subr.mxu0 0.0
        %354 = vmatpush1.msra.mxu0 0.0
        %355 = vmatprep.mubr.f32.mxu0 0.0
        %v356 = vand.u32 %v162, 4294901760
        %v357 = vsub.f32 %v162, %v356
        %v358 = vand.u32 %v357, 4294901760
        %v359 = vsub.f32 %v357, %v358
        %v360 = vand.u32 %v359, 4294901760
        %361 = vmatmul.mubr.f32.gmra.mrb[0].mxu0 %v360
        %v362 = vpop.f32.mrb[0].mxu0
        %v363 = vadd.f32 0.0, %v362
        %v364 = vpop.f32.mrb[0].mxu0
        %v365 = vadd.f32 0.0, %v364
        %366 = vdwg.mxu0
        %v367 = vand.u32 %v164, 4294901760
        %v368 = vsub.f32 %v164, %v367
        %v369 = vand.u32 %v368, 4294901760
        %v370 = vsub.f32 %v368, %v369
        %v371 = vand.u32 %v370, 4294901760
        %372 = vmatprep.subr.mxu0 %v371
        %v373 = vand.u32 %v163, 4294901760
        %v374 = vsub.f32 %v163, %v373
        %v375 = vand.u32 %v374, 4294901760
        %v376 = vsub.f32 %v374, %v375
        %v377 = vand.u32 %v376, 4294901760
        %378 = vmatpush1.msra.mxu0 %v377
        %v379 = vand.u32 %v170, 4294901760
        %v380 = vsub.f32 %v170, %v379
        %v381 = vand.u32 %v380, 4294901760
        %v382 = vsub.f32 %v380, %v381
        %v383 = vand.u32 %v382, 4294901760
        %384 = vmatprep.subr.mxu0 %v383
        %v385 = vand.u32 %v169, 4294901760
        %v386 = vsub.f32 %v169, %v385
        %v387 = vand.u32 %v386, 4294901760
        %v388 = vsub.f32 %v386, %v387
        %v389 = vand.u32 %v388, 4294901760
        %390 = vmatpush1.msra.mxu0 %v389
        %v391 = vand.u32 %v176, 4294901760
        %v392 = vsub.f32 %v176, %v391
        %v393 = vand.u32 %v392, 4294901760
        %v394 = vsub.f32 %v392, %v393
        %v395 = vand.u32 %v394, 4294901760
        %396 = vmatprep.subr.mxu0 %v395
        %v397 = vand.u32 %v175, 4294901760
        %v398 = vsub.f32 %v175, %v397
        %v399 = vand.u32 %v398, 4294901760
        %v400 = vsub.f32 %v398, %v399
        %v401 = vand.u32 %v400, 4294901760
        %402 = vmatpush1.msra.mxu0 %v401
        %v403 = vand.u32 %v182, 4294901760
        %v404 = vsub.f32 %v182, %v403
        %v405 = vand.u32 %v404, 4294901760
        %v406 = vsub.f32 %v404, %v405
        %v407 = vand.u32 %v406, 4294901760
        %408 = vmatprep.subr.mxu0 %v407
        %v409 = vand.u32 %v181, 4294901760
        %v410 = vsub.f32 %v181, %v409
        %v411 = vand.u32 %v410, 4294901760
        %v412 = vsub.f32 %v410, %v411
        %v413 = vand.u32 %v412, 4294901760
        %414 = vmatpush1.msra.mxu0 %v413
        %v415 = vand.u32 %v188, 4294901760
        %v416 = vsub.f32 %v188, %v415
        %v417 = vand.u32 %v416, 4294901760
        %v418 = vsub.f32 %v416, %v417
        %v419 = vand.u32 %v418, 4294901760
        %420 = vmatprep.subr.mxu0 %v419
        %v421 = vand.u32 %v187, 4294901760
        %v422 = vsub.f32 %v187, %v421
        %v423 = vand.u32 %v422, 4294901760
        %v424 = vsub.f32 %v422, %v423
        %v425 = vand.u32 %v424, 4294901760
        %426 = vmatpush1.msra.mxu0 %v425
        %v427 = vand.u32 %v194, 4294901760
        %v428 = vsub.f32 %v194, %v427
        %v429 = vand.u32 %v428, 4294901760
        %v430 = vsub.f32 %v428, %v429
        %v431 = vand.u32 %v430, 4294901760
        %432 = vmatprep.subr.mxu0 %v431
        %v433 = vand.u32 %v193, 4294901760
        %v434 = vsub.f32 %v193, %v433
        %v435 = vand.u32 %v434, 4294901760
        %v436 = vsub.f32 %v434, %v435
        %v437 = vand.u32 %v436, 4294901760
        %438 = vmatpush1.msra.mxu0 %v437
        %v439 = vand.u32 %v200, 4294901760
        %v440 = vsub.f32 %v200, %v439
        %v441 = vand.u32 %v440, 4294901760
        %v442 = vsub.f32 %v440, %v441
        %v443 = vand.u32 %v442, 4294901760
        %444 = vmatprep.subr.mxu0 %v443
        %v445 = vand.u32 %v199, 4294901760
        %v446 = vsub.f32 %v199, %v445
        %v447 = vand.u32 %v446, 4294901760
        %v448 = vsub.f32 %v446, %v447
        %v449 = vand.u32 %v448, 4294901760
        %450 = vmatpush1.msra.mxu0 %v449
        %v451 = vand.u32 %v206, 4294901760
        %v452 = vsub.f32 %v206, %v451
        %v453 = vand.u32 %v452, 4294901760
        %v454 = vsub.f32 %v452, %v453
        %v455 = vand.u32 %v454, 4294901760
        %456 = vmatprep.subr.mxu0 %v455
        %v457 = vand.u32 %v205, 4294901760
        %v458 = vsub.f32 %v205, %v457
        %v459 = vand.u32 %v458, 4294901760
        %v460 = vsub.f32 %v458, %v459
        %v461 = vand.u32 %v460, 4294901760
        %462 = vmatpush1.msra.mxu0 %v461
        %v463 = vand.u32 %v212, 4294901760
        %v464 = vsub.f32 %v212, %v463
        %v465 = vand.u32 %v464, 4294901760
        %v466 = vsub.f32 %v464, %v465
        %v467 = vand.u32 %v466, 4294901760
        %468 = vmatprep.subr.mxu0 %v467
        %v469 = vand.u32 %v211, 4294901760
        %v470 = vsub.f32 %v211, %v469
        %v471 = vand.u32 %v470, 4294901760
        %v472 = vsub.f32 %v470, %v471
        %v473 = vand.u32 %v472, 4294901760
        %474 = vmatpush1.msra.mxu0 %v473
        %v475 = vand.u32 %v218, 4294901760
        %v476 = vsub.f32 %v218, %v475
        %v477 = vand.u32 %v476, 4294901760
        %v478 = vsub.f32 %v476, %v477
        %v479 = vand.u32 %v478, 4294901760
        %480 = vmatprep.subr.mxu0 %v479
        %v481 = vand.u32 %v217, 4294901760
        %v482 = vsub.f32 %v217, %v481
        %v483 = vand.u32 %v482, 4294901760
        %v484 = vsub.f32 %v482, %v483
        %v485 = vand.u32 %v484, 4294901760
        %486 = vmatpush1.msra.mxu0 %v485
        %v487 = vand.u32 %v224, 4294901760
        %v488 = vsub.f32 %v224, %v487
        %v489 = vand.u32 %v488, 4294901760
        %v490 = vsub.f32 %v488, %v489
        %v491 = vand.u32 %v490, 4294901760
        %492 = vmatprep.subr.mxu0 %v491
        %v493 = vand.u32 %v223, 4294901760
        %v494 = vsub.f32 %v223, %v493
        %v495 = vand.u32 %v494, 4294901760
        %v496 = vsub.f32 %v494, %v495
        %v497 = vand.u32 %v496, 4294901760
        %498 = vmatpush1.msra.mxu0 %v497
        %v499 = vand.u32 %v230, 4294901760
        %v500 = vsub.f32 %v230, %v499
        %v501 = vand.u32 %v500, 4294901760
        %v502 = vsub.f32 %v500, %v501
        %v503 = vand.u32 %v502, 4294901760
        %504 = vmatprep.subr.mxu0 %v503
        %v505 = vand.u32 %v229, 4294901760
        %v506 = vsub.f32 %v229, %v505
        %v507 = vand.u32 %v506, 4294901760
        %v508 = vsub.f32 %v506, %v507
        %v509 = vand.u32 %v508, 4294901760
        %510 = vmatpush1.msra.mxu0 %v509
        %v511 = vand.u32 %v236, 4294901760
        %v512 = vsub.f32 %v236, %v511
        %v513 = vand.u32 %v512, 4294901760
        %v514 = vsub.f32 %v512, %v513
        %v515 = vand.u32 %v514, 4294901760
        %516 = vmatprep.subr.mxu0 %v515
        %v517 = vand.u32 %v235, 4294901760
        %v518 = vsub.f32 %v235, %v517
        %v519 = vand.u32 %v518, 4294901760
        %v520 = vsub.f32 %v518, %v519
        %v521 = vand.u32 %v520, 4294901760
        %522 = vmatpush1.msra.mxu0 %v521
        %v523 = vand.u32 %v242, 4294901760
        %v524 = vsub.f32 %v242, %v523
        %v525 = vand.u32 %v524, 4294901760
        %v526 = vsub.f32 %v524, %v525
        %v527 = vand.u32 %v526, 4294901760
        %528 = vmatprep.subr.mxu0 %v527
        %v529 = vand.u32 %v241, 4294901760
        %v530 = vsub.f32 %v241, %v529
        %v531 = vand.u32 %v530, 4294901760
        %v532 = vsub.f32 %v530, %v531
        %v533 = vand.u32 %v532, 4294901760
        %534 = vmatpush1.msra.mxu0 %v533
        %v535 = vand.u32 %v248, 4294901760
        %v536 = vsub.f32 %v248, %v535
        %v537 = vand.u32 %v536, 4294901760
        %v538 = vsub.f32 %v536, %v537
        %v539 = vand.u32 %v538, 4294901760
        %540 = vmatprep.subr.mxu0 %v539
        %v541 = vand.u32 %v247, 4294901760
        %v542 = vsub.f32 %v247, %v541
        %v543 = vand.u32 %v542, 4294901760
        %v544 = vsub.f32 %v542, %v543
        %v545 = vand.u32 %v544, 4294901760
        %546 = vmatpush1.msra.mxu0 %v545
        %v547 = vand.u32 %v254, 4294901760
        %v548 = vsub.f32 %v254, %v547
        %v549 = vand.u32 %v548, 4294901760
        %v550 = vsub.f32 %v548, %v549
        %v551 = vand.u32 %v550, 4294901760
        %552 = vmatprep.subr.mxu0 %v551
        %v553 = vand.u32 %v253, 4294901760
        %v554 = vsub.f32 %v253, %v553
        %v555 = vand.u32 %v554, 4294901760
        %v556 = vsub.f32 %v554, %v555
        %v557 = vand.u32 %v556, 4294901760
        %558 = vmatpush1.msra.mxu0 %v557
        %559 = vmatprep.subr.mxu0 0.0
        %560 = vmatpush1.msra.mxu0 0.0
        %561 = vmatprep.subr.mxu0 0.0
        %562 = vmatpush1.msra.mxu0 0.0
        %563 = vmatprep.subr.mxu0 0.0
        %564 = vmatpush1.msra.mxu0 0.0
        %565 = vmatprep.subr.mxu0 0.0
        %566 = vmatpush1.msra.mxu0 0.0
        %567 = vmatprep.subr.mxu0 0.0
        %568 = vmatpush1.msra.mxu0 0.0
        %569 = vmatprep.subr.mxu0 0.0
        %570 = vmatpush1.msra.mxu0 0.0
        %571 = vmatprep.subr.mxu0 0.0
        %572 = vmatpush1.msra.mxu0 0.0
        %573 = vmatprep.subr.mxu0 0.0
        %574 = vmatpush1.msra.mxu0 0.0
        %575 = vmatprep.subr.mxu0 0.0
        %576 = vmatpush1.msra.mxu0 0.0
        %577 = vmatprep.subr.mxu0 0.0
        %578 = vmatpush1.msra.mxu0 0.0
        %579 = vmatprep.subr.mxu0 0.0
        %580 = vmatpush1.msra.mxu0 0.0
        %581 = vmatprep.subr.mxu0 0.0
        %582 = vmatpush1.msra.mxu0 0.0
        %583 = vmatprep.subr.mxu0 0.0
        %584 = vmatpush1.msra.mxu0 0.0
        %585 = vmatprep.subr.mxu0 0.0
        %586 = vmatpush1.msra.mxu0 0.0
        %587 = vmatprep.subr.mxu0 0.0
        %588 = vmatpush1.msra.mxu0 0.0
        %589 = vmatprep.subr.mxu0 0.0
        %590 = vmatpush1.msra.mxu0 0.0
        %591 = vmatprep.mubr.f32.mxu0 0.0
        %v592 = vand.u32 %v162, 4294901760
        %593 = vmatmul.mubr.f32.gmra.mrb[0].mxu0 %v592
        %v594 = vpop.f32.mrb[0].mxu0
        %v595 = vadd.f32 %v363, %v594
        %v596 = vpop.f32.mrb[0].mxu0
        %v597 = vadd.f32 %v365, %v596
        %598 = vdwg.mxu0
        %v599 = vand.u32 %v164, 4294901760
        %v600 = vsub.f32 %v164, %v599
        %601 = vmatprep.subr.mxu0 %v600
        %v602 = vand.u32 %v163, 4294901760
        %v603 = vsub.f32 %v163, %v602
        %604 = vmatpush1.msra.mxu0 %v603
        %v605 = vand.u32 %v170, 4294901760
        %v606 = vsub.f32 %v170, %v605
        %607 = vmatprep.subr.mxu0 %v606
        %v608 = vand.u32 %v169, 4294901760
        %v609 = vsub.f32 %v169, %v608
        %610 = vmatpush1.msra.mxu0 %v609
        %v611 = vand.u32 %v176, 4294901760
        %v612 = vsub.f32 %v176, %v611
        %613 = vmatprep.subr.mxu0 %v612
        %v614 = vand.u32 %v175, 4294901760
        %v615 = vsub.f32 %v175, %v614
        %616 = vmatpush1.msra.mxu0 %v615
        %v617 = vand.u32 %v182, 4294901760
        %v618 = vsub.f32 %v182, %v617
        %619 = vmatprep.subr.mxu0 %v618
        %v620 = vand.u32 %v181, 4294901760
        %v621 = vsub.f32 %v181, %v620
        %622 = vmatpush1.msra.mxu0 %v621
        %v623 = vand.u32 %v188, 4294901760
        %v624 = vsub.f32 %v188, %v623
        %625 = vmatprep.subr.mxu0 %v624
        %v626 = vand.u32 %v187, 4294901760
        %v627 = vsub.f32 %v187, %v626
        %628 = vmatpush1.msra.mxu0 %v627
        %v629 = vand.u32 %v194, 4294901760
        %v630 = vsub.f32 %v194, %v629
        %631 = vmatprep.subr.mxu0 %v630
        %v632 = vand.u32 %v193, 4294901760
        %v633 = vsub.f32 %v193, %v632
        %634 = vmatpush1.msra.mxu0 %v633
        %v635 = vand.u32 %v200, 4294901760
        %v636 = vsub.f32 %v200, %v635
        %637 = vmatprep.subr.mxu0 %v636
        %v638 = vand.u32 %v199, 4294901760
        %v639 = vsub.f32 %v199, %v638
        %640 = vmatpush1.msra.mxu0 %v639
        %v641 = vand.u32 %v206, 4294901760
        %v642 = vsub.f32 %v206, %v641
        %643 = vmatprep.subr.mxu0 %v642
        %v644 = vand.u32 %v205, 4294901760
        %v645 = vsub.f32 %v205, %v644
        %646 = vmatpush1.msra.mxu0 %v645
        %v647 = vand.u32 %v212, 4294901760
        %v648 = vsub.f32 %v212, %v647
        %649 = vmatprep.subr.mxu0 %v648
        %v650 = vand.u32 %v211, 4294901760
        %v651 = vsub.f32 %v211, %v650
        %652 = vmatpush1.msra.mxu0 %v651
        %v653 = vand.u32 %v218, 4294901760
        %v654 = vsub.f32 %v218, %v653
        %655 = vmatprep.subr.mxu0 %v654
        %v656 = vand.u32 %v217, 4294901760
        %v657 = vsub.f32 %v217, %v656
        %658 = vmatpush1.msra.mxu0 %v657
        %v659 = vand.u32 %v224, 4294901760
        %v660 = vsub.f32 %v224, %v659
        %661 = vmatprep.subr.mxu0 %v660
        %v662 = vand.u32 %v223, 4294901760
        %v663 = vsub.f32 %v223, %v662
        %664 = vmatpush1.msra.mxu0 %v663
        %v665 = vand.u32 %v230, 4294901760
        %v666 = vsub.f32 %v230, %v665
        %667 = vmatprep.subr.mxu0 %v666
        %v668 = vand.u32 %v229, 4294901760
        %v669 = vsub.f32 %v229, %v668
        %670 = vmatpush1.msra.mxu0 %v669
        %v671 = vand.u32 %v236, 4294901760
        %v672 = vsub.f32 %v236, %v671
        %673 = vmatprep.subr.mxu0 %v672
        %v674 = vand.u32 %v235, 4294901760
        %v675 = vsub.f32 %v235, %v674
        %676 = vmatpush1.msra.mxu0 %v675
        %v677 = vand.u32 %v242, 4294901760
        %v678 = vsub.f32 %v242, %v677
        %679 = vmatprep.subr.mxu0 %v678
        %v680 = vand.u32 %v241, 4294901760
        %v681 = vsub.f32 %v241, %v680
        %682 = vmatpush1.msra.mxu0 %v681
        %v683 = vand.u32 %v248, 4294901760
        %v684 = vsub.f32 %v248, %v683
        %685 = vmatprep.subr.mxu0 %v684
        %v686 = vand.u32 %v247, 4294901760
        %v687 = vsub.f32 %v247, %v686
        %688 = vmatpush1.msra.mxu0 %v687
        %v689 = vand.u32 %v254, 4294901760
        %v690 = vsub.f32 %v254, %v689
        %691 = vmatprep.subr.mxu0 %v690
        %v692 = vand.u32 %v253, 4294901760
        %v693 = vsub.f32 %v253, %v692
        %694 = vmatpush1.msra.mxu0 %v693
        %695 = vmatprep.subr.mxu0 0.0
        %696 = vmatpush1.msra.mxu0 0.0
        %697 = vmatprep.subr.mxu0 0.0
        %698 = vmatpush1.msra.mxu0 0.0
        %699 = vmatprep.subr.mxu0 0.0
        %700 = vmatpush1.msra.mxu0 0.0
        %701 = vmatprep.subr.mxu0 0.0
        %702 = vmatpush1.msra.mxu0 0.0
        %703 = vmatprep.subr.mxu0 0.0
        %704 = vmatpush1.msra.mxu0 0.0
        %705 = vmatprep.subr.mxu0 0.0
        %706 = vmatpush1.msra.mxu0 0.0
        %707 = vmatprep.subr.mxu0 0.0
        %708 = vmatpush1.msra.mxu0 0.0
        %709 = vmatprep.subr.mxu0 0.0
        %710 = vmatpush1.msra.mxu0 0.0
        %711 = vmatprep.subr.mxu0 0.0
        %712 = vmatpush1.msra.mxu0 0.0
        %713 = vmatprep.subr.mxu0 0.0
        %714 = vmatpush1.msra.mxu0 0.0
        %715 = vmatprep.subr.mxu0 0.0
        %716 = vmatpush1.msra.mxu0 0.0
        %717 = vmatprep.subr.mxu0 0.0
        %718 = vmatpush1.msra.mxu0 0.0
        %719 = vmatprep.subr.mxu0 0.0
        %720 = vmatpush1.msra.mxu0 0.0
        %721 = vmatprep.subr.mxu0 0.0
        %722 = vmatpush1.msra.mxu0 0.0
        %723 = vmatprep.subr.mxu0 0.0
        %724 = vmatpush1.msra.mxu0 0.0
        %725 = vmatprep.subr.mxu0 0.0
        %726 = vmatpush1.msra.mxu0 0.0
        %727 = vmatprep.mubr.f32.mxu0 0.0
        %v728 = vand.u32 %v162, 4294901760
        %v729 = vsub.f32 %v162, %v728
        %730 = vmatmul.mubr.f32.gmra.mrb[0].mxu0 %v729
        %v731 = vpop.f32.mrb[0].mxu0
        %v732 = vadd.f32 %v595, %v731
        %v733 = vpop.f32.mrb[0].mxu0
        %v734 = vadd.f32 %v597, %v733
        %735 = vdwg.mxu0
        %v736 = vand.u32 %v164, 4294901760
        %737 = vmatprep.subr.mxu0 %v736
        %v738 = vand.u32 %v163, 4294901760
        %739 = vmatpush1.msra.mxu0 %v738
        %v740 = vand.u32 %v170, 4294901760
        %741 = vmatprep.subr.mxu0 %v740
        %v742 = vand.u32 %v169, 4294901760
        %743 = vmatpush1.msra.mxu0 %v742
        %v744 = vand.u32 %v176, 4294901760
        %745 = vmatprep.subr.mxu0 %v744
        %v746 = vand.u32 %v175, 4294901760
        %747 = vmatpush1.msra.mxu0 %v746
        %v748 = vand.u32 %v182, 4294901760
        %749 = vmatprep.subr.mxu0 %v748
        %v750 = vand.u32 %v181, 4294901760
        %751 = vmatpush1.msra.mxu0 %v750
        %v752 = vand.u32 %v188, 4294901760
        %753 = vmatprep.subr.mxu0 %v752
        %v754 = vand.u32 %v187, 4294901760
        %755 = vmatpush1.msra.mxu0 %v754
        %v756 = vand.u32 %v194, 4294901760
        %757 = vmatprep.subr.mxu0 %v756
        %v758 = vand.u32 %v193, 4294901760
        %759 = vmatpush1.msra.mxu0 %v758
        %v760 = vand.u32 %v200, 4294901760
        %761 = vmatprep.subr.mxu0 %v760
        %v762 = vand.u32 %v199, 4294901760
        %763 = vmatpush1.msra.mxu0 %v762
        %v764 = vand.u32 %v206, 4294901760
        %765 = vmatprep.subr.mxu0 %v764
        %v766 = vand.u32 %v205, 4294901760
        %767 = vmatpush1.msra.mxu0 %v766
        %v768 = vand.u32 %v212, 4294901760
        %769 = vmatprep.subr.mxu0 %v768
        %v770 = vand.u32 %v211, 4294901760
        %771 = vmatpush1.msra.mxu0 %v770
        %v772 = vand.u32 %v218, 4294901760
        %773 = vmatprep.subr.mxu0 %v772
        %v774 = vand.u32 %v217, 4294901760
        %775 = vmatpush1.msra.mxu0 %v774
        %v776 = vand.u32 %v224, 4294901760
        %777 = vmatprep.subr.mxu0 %v776
        %v778 = vand.u32 %v223, 4294901760
        %779 = vmatpush1.msra.mxu0 %v778
        %v780 = vand.u32 %v230, 4294901760
        %781 = vmatprep.subr.mxu0 %v780
        %v782 = vand.u32 %v229, 4294901760
        %783 = vmatpush1.msra.mxu0 %v782
        %v784 = vand.u32 %v236, 4294901760
        %785 = vmatprep.subr.mxu0 %v784
        %v786 = vand.u32 %v235, 4294901760
        %787 = vmatpush1.msra.mxu0 %v786
        %v788 = vand.u32 %v242, 4294901760
        %789 = vmatprep.subr.mxu0 %v788
        %v790 = vand.u32 %v241, 4294901760
        %791 = vmatpush1.msra.mxu0 %v790
        %v792 = vand.u32 %v248, 4294901760
        %793 = vmatprep.subr.mxu0 %v792
        %v794 = vand.u32 %v247, 4294901760
        %795 = vmatpush1.msra.mxu0 %v794
        %v796 = vand.u32 %v254, 4294901760
        %797 = vmatprep.subr.mxu0 %v796
        %v798 = vand.u32 %v253, 4294901760
        %799 = vmatpush1.msra.mxu0 %v798
        %800 = vmatprep.subr.mxu0 0.0
        %801 = vmatpush1.msra.mxu0 0.0
        %802 = vmatprep.subr.mxu0 0.0
        %803 = vmatpush1.msra.mxu0 0.0
        %804 = vmatprep.subr.mxu0 0.0
        %805 = vmatpush1.msra.mxu0 0.0
        %806 = vmatprep.subr.mxu0 0.0
        %807 = vmatpush1.msra.mxu0 0.0
        %808 = vmatprep.subr.mxu0 0.0
        %809 = vmatpush1.msra.mxu0 0.0
        %810 = vmatprep.subr.mxu0 0.0
        %811 = vmatpush1.msra.mxu0 0.0
        %812 = vmatprep.subr.mxu0 0.0
        %813 = vmatpush1.msra.mxu0 0.0
        %814 = vmatprep.subr.mxu0 0.0
        %815 = vmatpush1.msra.mxu0 0.0
        %816 = vmatprep.subr.mxu0 0.0
        %817 = vmatpush1.msra.mxu0 0.0
        %818 = vmatprep.subr.mxu0 0.0
        %819 = vmatpush1.msra.mxu0 0.0
        %820 = vmatprep.subr.mxu0 0.0
        %821 = vmatpush1.msra.mxu0 0.0
        %822 = vmatprep.subr.mxu0 0.0
        %823 = vmatpush1.msra.mxu0 0.0
        %824 = vmatprep.subr.mxu0 0.0
        %825 = vmatpush1.msra.mxu0 0.0
        %826 = vmatprep.subr.mxu0 0.0
        %827 = vmatpush1.msra.mxu0 0.0
        %828 = vmatprep.subr.mxu0 0.0
        %829 = vmatpush1.msra.mxu0 0.0
        %830 = vmatprep.subr.mxu0 0.0
        %831 = vmatpush1.msra.mxu0 0.0
        %832 = vmatprep.mubr.f32.mxu0 0.0
        %v833 = vand.u32 %v162, 4294901760
        %v834 = vsub.f32 %v162, %v833
        %v835 = vand.u32 %v834, 4294901760
        %836 = vmatmul.mubr.f32.gmra.mrb[0].mxu0 %v835
        %v837 = vpop.f32.mrb[0].mxu0
        %v838 = vadd.f32 %v732, %v837
        %v839 = vpop.f32.mrb[0].mxu0
        %v840 = vadd.f32 %v734, %v839
        %841 = vdwg.mxu0
        %v842 = vand.u32 %v164, 4294901760
        %v843 = vsub.f32 %v164, %v842
        %v844 = vand.u32 %v843, 4294901760
        %845 = vmatprep.subr.mxu0 %v844
        %v846 = vand.u32 %v163, 4294901760
        %v847 = vsub.f32 %v163, %v846
        %v848 = vand.u32 %v847, 4294901760
        %849 = vmatpush1.msra.mxu0 %v848
        %v850 = vand.u32 %v170, 4294901760
        %v851 = vsub.f32 %v170, %v850
        %v852 = vand.u32 %v851, 4294901760
        %853 = vmatprep.subr.mxu0 %v852
        %v854 = vand.u32 %v169, 4294901760
        %v855 = vsub.f32 %v169, %v854
        %v856 = vand.u32 %v855, 4294901760
        %857 = vmatpush1.msra.mxu0 %v856
        %v858 = vand.u32 %v176, 4294901760
        %v859 = vsub.f32 %v176, %v858
        %v860 = vand.u32 %v859, 4294901760
        %861 = vmatprep.subr.mxu0 %v860
        %v862 = vand.u32 %v175, 4294901760
        %v863 = vsub.f32 %v175, %v862
        %v864 = vand.u32 %v863, 4294901760
        %865 = vmatpush1.msra.mxu0 %v864
        %v866 = vand.u32 %v182, 4294901760
        %v867 = vsub.f32 %v182, %v866
        %v868 = vand.u32 %v867, 4294901760
        %869 = vmatprep.subr.mxu0 %v868
        %v870 = vand.u32 %v181, 4294901760
        %v871 = vsub.f32 %v181, %v870
        %v872 = vand.u32 %v871, 4294901760
        %873 = vmatpush1.msra.mxu0 %v872
        %v874 = vand.u32 %v188, 4294901760
        %v875 = vsub.f32 %v188, %v874
        %v876 = vand.u32 %v875, 4294901760
        %877 = vmatprep.subr.mxu0 %v876
        %v878 = vand.u32 %v187, 4294901760
        %v879 = vsub.f32 %v187, %v878
        %v880 = vand.u32 %v879, 4294901760
        %881 = vmatpush1.msra.mxu0 %v880
        %v882 = vand.u32 %v194, 4294901760
        %v883 = vsub.f32 %v194, %v882
        %v884 = vand.u32 %v883, 4294901760
        %885 = vmatprep.subr.mxu0 %v884
        %v886 = vand.u32 %v193, 4294901760
        %v887 = vsub.f32 %v193, %v886
        %v888 = vand.u32 %v887, 4294901760
        %889 = vmatpush1.msra.mxu0 %v888
        %v890 = vand.u32 %v200, 4294901760
        %v891 = vsub.f32 %v200, %v890
        %v892 = vand.u32 %v891, 4294901760
        %893 = vmatprep.subr.mxu0 %v892
        %v894 = vand.u32 %v199, 4294901760
        %v895 = vsub.f32 %v199, %v894
        %v896 = vand.u32 %v895, 4294901760
        %897 = vmatpush1.msra.mxu0 %v896
        %v898 = vand.u32 %v206, 4294901760
        %v899 = vsub.f32 %v206, %v898
        %v900 = vand.u32 %v899, 4294901760
        %901 = vmatprep.subr.mxu0 %v900
        %v902 = vand.u32 %v205, 4294901760
        %v903 = vsub.f32 %v205, %v902
        %v904 = vand.u32 %v903, 4294901760
        %905 = vmatpush1.msra.mxu0 %v904
        %v906 = vand.u32 %v212, 4294901760
        %v907 = vsub.f32 %v212, %v906
        %v908 = vand.u32 %v907, 4294901760
        %909 = vmatprep.subr.mxu0 %v908
        %v910 = vand.u32 %v211, 4294901760
        %v911 = vsub.f32 %v211, %v910
        %v912 = vand.u32 %v911, 4294901760
        %913 = vmatpush1.msra.mxu0 %v912
        %v914 = vand.u32 %v218, 4294901760
        %v915 = vsub.f32 %v218, %v914
        %v916 = vand.u32 %v915, 4294901760
        %917 = vmatprep.subr.mxu0 %v916
        %v918 = vand.u32 %v217, 4294901760
        %v919 = vsub.f32 %v217, %v918
        %v920 = vand.u32 %v919, 4294901760
        %921 = vmatpush1.msra.mxu0 %v920
        %v922 = vand.u32 %v224, 4294901760
        %v923 = vsub.f32 %v224, %v922
        %v924 = vand.u32 %v923, 4294901760
        %925 = vmatprep.subr.mxu0 %v924
        %v926 = vand.u32 %v223, 4294901760
        %v927 = vsub.f32 %v223, %v926
        %v928 = vand.u32 %v927, 4294901760
        %929 = vmatpush1.msra.mxu0 %v928
        %v930 = vand.u32 %v230, 4294901760
        %v931 = vsub.f32 %v230, %v930
        %v932 = vand.u32 %v931, 4294901760
        %933 = vmatprep.subr.mxu0 %v932
        %v934 = vand.u32 %v229, 4294901760
        %v935 = vsub.f32 %v229, %v934
        %v936 = vand.u32 %v935, 4294901760
        %937 = vmatpush1.msra.mxu0 %v936
        %v938 = vand.u32 %v236, 4294901760
        %v939 = vsub.f32 %v236, %v938
        %v940 = vand.u32 %v939, 4294901760
        %941 = vmatprep.subr.mxu0 %v940
        %v942 = vand.u32 %v235, 4294901760
        %v943 = vsub.f32 %v235, %v942
        %v944 = vand.u32 %v943, 4294901760
        %945 = vmatpush1.msra.mxu0 %v944
        %v946 = vand.u32 %v242, 4294901760
        %v947 = vsub.f32 %v242, %v946
        %v948 = vand.u32 %v947, 4294901760
        %949 = vmatprep.subr.mxu0 %v948
        %v950 = vand.u32 %v241, 4294901760
        %v951 = vsub.f32 %v241, %v950
        %v952 = vand.u32 %v951, 4294901760
        %953 = vmatpush1.msra.mxu0 %v952
        %v954 = vand.u32 %v248, 4294901760
        %v955 = vsub.f32 %v248, %v954
        %v956 = vand.u32 %v955, 4294901760
        %957 = vmatprep.subr.mxu0 %v956
        %v958 = vand.u32 %v247, 4294901760
        %v959 = vsub.f32 %v247, %v958
        %v960 = vand.u32 %v959, 4294901760
        %961 = vmatpush1.msra.mxu0 %v960
        %v962 = vand.u32 %v254, 4294901760
        %v963 = vsub.f32 %v254, %v962
        %v964 = vand.u32 %v963, 4294901760
        %965 = vmatprep.subr.mxu0 %v964
        %v966 = vand.u32 %v253, 4294901760
        %v967 = vsub.f32 %v253, %v966
        %v968 = vand.u32 %v967, 4294901760
        %969 = vmatpush1.msra.mxu0 %v968
        %970 = vmatprep.subr.mxu0 0.0
        %971 = vmatpush1.msra.mxu0 0.0
        %972 = vmatprep.subr.mxu0 0.0
        %973 = vmatpush1.msra.mxu0 0.0
        %974 = vmatprep.subr.mxu0 0.0
        %975 = vmatpush1.msra.mxu0 0.0
        %976 = vmatprep.subr.mxu0 0.0
        %977 = vmatpush1.msra.mxu0 0.0
        %978 = vmatprep.subr.mxu0 0.0
        %979 = vmatpush1.msra.mxu0 0.0
        %980 = vmatprep.subr.mxu0 0.0
        %981 = vmatpush1.msra.mxu0 0.0
        %982 = vmatprep.subr.mxu0 0.0
        %983 = vmatpush1.msra.mxu0 0.0
        %984 = vmatprep.subr.mxu0 0.0
        %985 = vmatpush1.msra.mxu0 0.0
        %986 = vmatprep.subr.mxu0 0.0
        %987 = vmatpush1.msra.mxu0 0.0
        %988 = vmatprep.subr.mxu0 0.0
        %989 = vmatpush1.msra.mxu0 0.0
        %990 = vmatprep.subr.mxu0 0.0
        %991 = vmatpush1.msra.mxu0 0.0
        %992 = vmatprep.subr.mxu0 0.0
        %993 = vmatpush1.msra.mxu0 0.0
        %994 = vmatprep.subr.mxu0 0.0
        %995 = vmatpush1.msra.mxu0 0.0
        %996 = vmatprep.subr.mxu0 0.0
        %997 = vmatpush1.msra.mxu0 0.0
        %998 = vmatprep.subr.mxu0 0.0
        %999 = vmatpush1.msra.mxu0 0.0
        %1000 = vmatprep.subr.mxu0 0.0
        %1001 = vmatpush1.msra.mxu0 0.0
        %1002 = vmatprep.mubr.f32.mxu0 0.0
        %v1003 = vand.u32 %v162, 4294901760
        %1004 = vmatmul.mubr.f32.gmra.mrb[0].mxu0 %v1003
        %v1005 = vpop.f32.mrb[0].mxu0
        %v1006 = vadd.f32 %v838, %v1005
        %v1007 = vpop.f32.mrb[0].mxu0
        %v1008 = vadd.f32 %v840, %v1007
        %1009 = vdwg.mxu0
        %v1010 = vand.u32 %v164, 4294901760
        %1011 = vmatprep.subr.mxu0 %v1010
        %v1012 = vand.u32 %v163, 4294901760
        %1013 = vmatpush1.msra.mxu0 %v1012
        %v1014 = vand.u32 %v170, 4294901760
        %1015 = vmatprep.subr.mxu0 %v1014
        %v1016 = vand.u32 %v169, 4294901760
        %1017 = vmatpush1.msra.mxu0 %v1016
        %v1018 = vand.u32 %v176, 4294901760
        %1019 = vmatprep.subr.mxu0 %v1018
        %v1020 = vand.u32 %v175, 4294901760
        %1021 = vmatpush1.msra.mxu0 %v1020
        %v1022 = vand.u32 %v182, 4294901760
        %1023 = vmatprep.subr.mxu0 %v1022
        %v1024 = vand.u32 %v181, 4294901760
        %1025 = vmatpush1.msra.mxu0 %v1024
        %v1026 = vand.u32 %v188, 4294901760
        %1027 = vmatprep.subr.mxu0 %v1026
        %v1028 = vand.u32 %v187, 4294901760
        %1029 = vmatpush1.msra.mxu0 %v1028
        %v1030 = vand.u32 %v194, 4294901760
        %1031 = vmatprep.subr.mxu0 %v1030
        %v1032 = vand.u32 %v193, 4294901760
        %1033 = vmatpush1.msra.mxu0 %v1032
        %v1034 = vand.u32 %v200, 4294901760
        %1035 = vmatprep.subr.mxu0 %v1034
        %v1036 = vand.u32 %v199, 4294901760
        %1037 = vmatpush1.msra.mxu0 %v1036
        %v1038 = vand.u32 %v206, 4294901760
        %1039 = vmatprep.subr.mxu0 %v1038
        %v1040 = vand.u32 %v205, 4294901760
        %1041 = vmatpush1.msra.mxu0 %v1040
        %v1042 = vand.u32 %v212, 4294901760
        %1043 = vmatprep.subr.mxu0 %v1042
        %v1044 = vand.u32 %v211, 4294901760
        %1045 = vmatpush1.msra.mxu0 %v1044
        %v1046 = vand.u32 %v218, 4294901760
        %1047 = vmatprep.subr.mxu0 %v1046
        %v1048 = vand.u32 %v217, 4294901760
        %1049 = vmatpush1.msra.mxu0 %v1048
        %v1050 = vand.u32 %v224, 4294901760
        %1051 = vmatprep.subr.mxu0 %v1050
        %v1052 = vand.u32 %v223, 4294901760
        %1053 = vmatpush1.msra.mxu0 %v1052
        %v1054 = vand.u32 %v230, 4294901760
        %1055 = vmatprep.subr.mxu0 %v1054
        %v1056 = vand.u32 %v229, 4294901760
        %1057 = vmatpush1.msra.mxu0 %v1056
        %v1058 = vand.u32 %v236, 4294901760
        %1059 = vmatprep.subr.mxu0 %v1058
        %v1060 = vand.u32 %v235, 4294901760
        %1061 = vmatpush1.msra.mxu0 %v1060
        %v1062 = vand.u32 %v242, 4294901760
        %1063 = vmatprep.subr.mxu0 %v1062
        %v1064 = vand.u32 %v241, 4294901760
        %1065 = vmatpush1.msra.mxu0 %v1064
        %v1066 = vand.u32 %v248, 4294901760
        %1067 = vmatprep.subr.mxu0 %v1066
        %v1068 = vand.u32 %v247, 4294901760
        %1069 = vmatpush1.msra.mxu0 %v1068
        %v1070 = vand.u32 %v254, 4294901760
        %1071 = vmatprep.subr.mxu0 %v1070
        %v1072 = vand.u32 %v253, 4294901760
        %1073 = vmatpush1.msra.mxu0 %v1072
        %1074 = vmatprep.subr.mxu0 0.0
        %1075 = vmatpush1.msra.mxu0 0.0
        %1076 = vmatprep.subr.mxu0 0.0
        %1077 = vmatpush1.msra.mxu0 0.0
        %1078 = vmatprep.subr.mxu0 0.0
        %1079 = vmatpush1.msra.mxu0 0.0
        %1080 = vmatprep.subr.mxu0 0.0
        %1081 = vmatpush1.msra.mxu0 0.0
        %1082 = vmatprep.subr.mxu0 0.0
        %1083 = vmatpush1.msra.mxu0 0.0
        %1084 = vmatprep.subr.mxu0 0.0
        %1085 = vmatpush1.msra.mxu0 0.0
        %1086 = vmatprep.subr.mxu0 0.0
        %1087 = vmatpush1.msra.mxu0 0.0
        %1088 = vmatprep.subr.mxu0 0.0
        %1089 = vmatpush1.msra.mxu0 0.0
        %1090 = vmatprep.subr.mxu0 0.0
        %1091 = vmatpush1.msra.mxu0 0.0
        %1092 = vmatprep.subr.mxu0 0.0
        %1093 = vmatpush1.msra.mxu0 0.0
        %1094 = vmatprep.subr.mxu0 0.0
        %1095 = vmatpush1.msra.mxu0 0.0
        %1096 = vmatprep.subr.mxu0 0.0
        %1097 = vmatpush1.msra.mxu0 0.0
        %1098 = vmatprep.subr.mxu0 0.0
        %1099 = vmatpush1.msra.mxu0 0.0
        %1100 = vmatprep.subr.mxu0 0.0
        %1101 = vmatpush1.msra.mxu0 0.0
        %1102 = vmatprep.subr.mxu0 0.0
        %1103 = vmatpush1.msra.mxu0 0.0
        %1104 = vmatprep.subr.mxu0 0.0
        %1105 = vmatpush1.msra.mxu0 0.0
        %1106 = vmatprep.mubr.f32.mxu0 0.0
        %v1107 = vand.u32 %v162, 4294901760
        %1108 = vmatmul.mubr.f32.gmra.mrb[0].mxu0 %v1107
        %v1109 = vpop.f32.mrb[0].mxu0
        %v1110 = vadd.f32 %v1006, %v1109
        %v1111 = vpop.f32.mrb[0].mxu0
        %v1112 = vadd.f32 %v1008, %v1111
        %1113 = vdwg.mxu0
        %v1114 = vand.u32 %v166, 4294901760
        %1115 = vmatprep.subr.mxu0 %v1114
        %v1116 = vand.u32 %v165, 4294901760
        %1117 = vmatpush1.msra.mxu0 %v1116
        %v1118 = vand.u32 %v172, 4294901760
        %1119 = vmatprep.subr.mxu0 %v1118
        %v1120 = vand.u32 %v171, 4294901760
        %1121 = vmatpush1.msra.mxu0 %v1120
        %v1122 = vand.u32 %v178, 4294901760
        %1123 = vmatprep.subr.mxu0 %v1122
        %v1124 = vand.u32 %v177, 4294901760
        %1125 = vmatpush1.msra.mxu0 %v1124
        %v1126 = vand.u32 %v184, 4294901760
        %1127 = vmatprep.subr.mxu0 %v1126
        %v1128 = vand.u32 %v183, 4294901760
        %1129 = vmatpush1.msra.mxu0 %v1128
        %v1130 = vand.u32 %v190, 4294901760
        %1131 = vmatprep.subr.mxu0 %v1130
        %v1132 = vand.u32 %v189, 4294901760
        %1133 = vmatpush1.msra.mxu0 %v1132
        %v1134 = vand.u32 %v196, 4294901760
        %1135 = vmatprep.subr.mxu0 %v1134
        %v1136 = vand.u32 %v195, 4294901760
        %1137 = vmatpush1.msra.mxu0 %v1136
        %v1138 = vand.u32 %v202, 4294901760
        %1139 = vmatprep.subr.mxu0 %v1138
        %v1140 = vand.u32 %v201, 4294901760
        %1141 = vmatpush1.msra.mxu0 %v1140
        %v1142 = vand.u32 %v208, 4294901760
        %1143 = vmatprep.subr.mxu0 %v1142
        %v1144 = vand.u32 %v207, 4294901760
        %1145 = vmatpush1.msra.mxu0 %v1144
        %v1146 = vand.u32 %v214, 4294901760
        %1147 = vmatprep.subr.mxu0 %v1146
        %v1148 = vand.u32 %v213, 4294901760
        %1149 = vmatpush1.msra.mxu0 %v1148
        %v1150 = vand.u32 %v220, 4294901760
        %1151 = vmatprep.subr.mxu0 %v1150
        %v1152 = vand.u32 %v219, 4294901760
        %1153 = vmatpush1.msra.mxu0 %v1152
        %v1154 = vand.u32 %v226, 4294901760
        %1155 = vmatprep.subr.mxu0 %v1154
        %v1156 = vand.u32 %v225, 4294901760
        %1157 = vmatpush1.msra.mxu0 %v1156
        %v1158 = vand.u32 %v232, 4294901760
        %1159 = vmatprep.subr.mxu0 %v1158
        %v1160 = vand.u32 %v231, 4294901760
        %1161 = vmatpush1.msra.mxu0 %v1160
        %v1162 = vand.u32 %v238, 4294901760
        %1163 = vmatprep.subr.mxu0 %v1162
        %v1164 = vand.u32 %v237, 4294901760
        %1165 = vmatpush1.msra.mxu0 %v1164
        %v1166 = vand.u32 %v244, 4294901760
        %1167 = vmatprep.subr.mxu0 %v1166
        %v1168 = vand.u32 %v243, 4294901760
        %1169 = vmatpush1.msra.mxu0 %v1168
        %v1170 = vand.u32 %v250, 4294901760
        %1171 = vmatprep.subr.mxu0 %v1170
        %v1172 = vand.u32 %v249, 4294901760
        %1173 = vmatpush1.msra.mxu0 %v1172
        %v1174 = vand.u32 %v256, 4294901760
        %1175 = vmatprep.subr.mxu0 %v1174
        %v1176 = vand.u32 %v255, 4294901760
        %1177 = vmatpush1.msra.mxu0 %v1176
        %1178 = vmatprep.subr.mxu0 0.0
        %1179 = vmatpush1.msra.mxu0 0.0
        %1180 = vmatprep.subr.mxu0 0.0
        %1181 = vmatpush1.msra.mxu0 0.0
        %1182 = vmatprep.subr.mxu0 0.0
        %1183 = vmatpush1.msra.mxu0 0.0
        %1184 = vmatprep.subr.mxu0 0.0
        %1185 = vmatpush1.msra.mxu0 0.0
        %1186 = vmatprep.subr.mxu0 0.0
        %1187 = vmatpush1.msra.mxu0 0.0
        %1188 = vmatprep.subr.mxu0 0.0
        %1189 = vmatpush1.msra.mxu0 0.0
        %1190 = vmatprep.subr.mxu0 0.0
        %1191 = vmatpush1.msra.mxu0 0.0
        %1192 = vmatprep.subr.mxu0 0.0
        %1193 = vmatpush1.msra.mxu0 0.0
        %1194 = vmatprep.subr.mxu0 0.0
        %1195 = vmatpush1.msra.mxu0 0.0
        %1196 = vmatprep.subr.mxu0 0.0
        %1197 = vmatpush1.msra.mxu0 0.0
        %1198 = vmatprep.subr.mxu0 0.0
        %1199 = vmatpush1.msra.mxu0 0.0
        %1200 = vmatprep.subr.mxu0 0.0
        %1201 = vmatpush1.msra.mxu0 0.0
        %1202 = vmatprep.subr.mxu0 0.0
        %1203 = vmatpush1.msra.mxu0 0.0
        %1204 = vmatprep.subr.mxu0 0.0
        %1205 = vmatpush1.msra.mxu0 0.0
        %1206 = vmatprep.subr.mxu0 0.0
        %1207 = vmatpush1.msra.mxu0 0.0
        %1208 = vmatprep.subr.mxu0 0.0
        %1209 = vmatpush1.msra.mxu0 0.0
        %1210 = vmatprep.mubr.f32.mxu0 0.0
        %v1211 = vand.u32 %v162, 4294901760
        %v1212 = vsub.f32 %v162, %v1211
        %v1213 = vand.u32 %v1212, 4294901760
        %v1214 = vsub.f32 %v1212, %v1213
        %v1215 = vand.u32 %v1214, 4294901760
        %1216 = vmatmul.mubr.f32.gmra.mrb[0].mxu0 %v1215
        %v1217 = vpop.f32.mrb[0].mxu0
        %v1218 = vadd.f32 0.0, %v1217
        %v1219 = vpop.f32.mrb[0].mxu0
        %v1220 = vadd.f32 0.0, %v1219
        %1221 = vdwg.mxu0
        %v1222 = vand.u32 %v166, 4294901760
        %v1223 = vsub.f32 %v166, %v1222
        %v1224 = vand.u32 %v1223, 4294901760
        %v1225 = vsub.f32 %v1223, %v1224
        %v1226 = vand.u32 %v1225, 4294901760
        %1227 = vmatprep.subr.mxu0 %v1226
        %v1228 = vand.u32 %v165, 4294901760
        %v1229 = vsub.f32 %v165, %v1228
        %v1230 = vand.u32 %v1229, 4294901760
        %v1231 = vsub.f32 %v1229, %v1230
        %v1232 = vand.u32 %v1231, 4294901760
        %1233 = vmatpush1.msra.mxu0 %v1232
        %v1234 = vand.u32 %v172, 4294901760
        %v1235 = vsub.f32 %v172, %v1234
        %v1236 = vand.u32 %v1235, 4294901760
        %v1237 = vsub.f32 %v1235, %v1236
        %v1238 = vand.u32 %v1237, 4294901760
        %1239 = vmatprep.subr.mxu0 %v1238
        %v1240 = vand.u32 %v171, 4294901760
        %v1241 = vsub.f32 %v171, %v1240
        %v1242 = vand.u32 %v1241, 4294901760
        %v1243 = vsub.f32 %v1241, %v1242
        %v1244 = vand.u32 %v1243, 4294901760
        %1245 = vmatpush1.msra.mxu0 %v1244
        %v1246 = vand.u32 %v178, 4294901760
        %v1247 = vsub.f32 %v178, %v1246
        %v1248 = vand.u32 %v1247, 4294901760
        %v1249 = vsub.f32 %v1247, %v1248
        %v1250 = vand.u32 %v1249, 4294901760
        %1251 = vmatprep.subr.mxu0 %v1250
        %v1252 = vand.u32 %v177, 4294901760
        %v1253 = vsub.f32 %v177, %v1252
        %v1254 = vand.u32 %v1253, 4294901760
        %v1255 = vsub.f32 %v1253, %v1254
        %v1256 = vand.u32 %v1255, 4294901760
        %1257 = vmatpush1.msra.mxu0 %v1256
        %v1258 = vand.u32 %v184, 4294901760
        %v1259 = vsub.f32 %v184, %v1258
        %v1260 = vand.u32 %v1259, 4294901760
        %v1261 = vsub.f32 %v1259, %v1260
        %v1262 = vand.u32 %v1261, 4294901760
        %1263 = vmatprep.subr.mxu0 %v1262
        %v1264 = vand.u32 %v183, 4294901760
        %v1265 = vsub.f32 %v183, %v1264
        %v1266 = vand.u32 %v1265, 4294901760
        %v1267 = vsub.f32 %v1265, %v1266
        %v1268 = vand.u32 %v1267, 4294901760
        %1269 = vmatpush1.msra.mxu0 %v1268
        %v1270 = vand.u32 %v190, 4294901760
        %v1271 = vsub.f32 %v190, %v1270
        %v1272 = vand.u32 %v1271, 4294901760
        %v1273 = vsub.f32 %v1271, %v1272
        %v1274 = vand.u32 %v1273, 4294901760
        %1275 = vmatprep.subr.mxu0 %v1274
        %v1276 = vand.u32 %v189, 4294901760
        %v1277 = vsub.f32 %v189, %v1276
        %v1278 = vand.u32 %v1277, 4294901760
        %v1279 = vsub.f32 %v1277, %v1278
        %v1280 = vand.u32 %v1279, 4294901760
        %1281 = vmatpush1.msra.mxu0 %v1280
        %v1282 = vand.u32 %v196, 4294901760
        %v1283 = vsub.f32 %v196, %v1282
        %v1284 = vand.u32 %v1283, 4294901760
        %v1285 = vsub.f32 %v1283, %v1284
        %v1286 = vand.u32 %v1285, 4294901760
        %1287 = vmatprep.subr.mxu0 %v1286
        %v1288 = vand.u32 %v195, 4294901760
        %v1289 = vsub.f32 %v195, %v1288
        %v1290 = vand.u32 %v1289, 4294901760
        %v1291 = vsub.f32 %v1289, %v1290
        %v1292 = vand.u32 %v1291, 4294901760
        %1293 = vmatpush1.msra.mxu0 %v1292
        %v1294 = vand.u32 %v202, 4294901760
        %v1295 = vsub.f32 %v202, %v1294
        %v1296 = vand.u32 %v1295, 4294901760
        %v1297 = vsub.f32 %v1295, %v1296
        %v1298 = vand.u32 %v1297, 4294901760
        %1299 = vmatprep.subr.mxu0 %v1298
        %v1300 = vand.u32 %v201, 4294901760
        %v1301 = vsub.f32 %v201, %v1300
        %v1302 = vand.u32 %v1301, 4294901760
        %v1303 = vsub.f32 %v1301, %v1302
        %v1304 = vand.u32 %v1303, 4294901760
        %1305 = vmatpush1.msra.mxu0 %v1304
        %v1306 = vand.u32 %v208, 4294901760
        %v1307 = vsub.f32 %v208, %v1306
        %v1308 = vand.u32 %v1307, 4294901760
        %v1309 = vsub.f32 %v1307, %v1308
        %v1310 = vand.u32 %v1309, 4294901760
        %1311 = vmatprep.subr.mxu0 %v1310
        %v1312 = vand.u32 %v207, 4294901760
        %v1313 = vsub.f32 %v207, %v1312
        %v1314 = vand.u32 %v1313, 4294901760
        %v1315 = vsub.f32 %v1313, %v1314
        %v1316 = vand.u32 %v1315, 4294901760
        %1317 = vmatpush1.msra.mxu0 %v1316
        %v1318 = vand.u32 %v214, 4294901760
        %v1319 = vsub.f32 %v214, %v1318
        %v1320 = vand.u32 %v1319, 4294901760
        %v1321 = vsub.f32 %v1319, %v1320
        %v1322 = vand.u32 %v1321, 4294901760
        %1323 = vmatprep.subr.mxu0 %v1322
        %v1324 = vand.u32 %v213, 4294901760
        %v1325 = vsub.f32 %v213, %v1324
        %v1326 = vand.u32 %v1325, 4294901760
        %v1327 = vsub.f32 %v1325, %v1326
        %v1328 = vand.u32 %v1327, 4294901760
        %1329 = vmatpush1.msra.mxu0 %v1328
        %v1330 = vand.u32 %v220, 4294901760
        %v1331 = vsub.f32 %v220, %v1330
        %v1332 = vand.u32 %v1331, 4294901760
        %v1333 = vsub.f32 %v1331, %v1332
        %v1334 = vand.u32 %v1333, 4294901760
        %1335 = vmatprep.subr.mxu0 %v1334
        %v1336 = vand.u32 %v219, 4294901760
        %v1337 = vsub.f32 %v219, %v1336
        %v1338 = vand.u32 %v1337, 4294901760
        %v1339 = vsub.f32 %v1337, %v1338
        %v1340 = vand.u32 %v1339, 4294901760
        %1341 = vmatpush1.msra.mxu0 %v1340
        %v1342 = vand.u32 %v226, 4294901760
        %v1343 = vsub.f32 %v226, %v1342
        %v1344 = vand.u32 %v1343, 4294901760
        %v1345 = vsub.f32 %v1343, %v1344
        %v1346 = vand.u32 %v1345, 4294901760
        %1347 = vmatprep.subr.mxu0 %v1346
        %v1348 = vand.u32 %v225, 4294901760
        %v1349 = vsub.f32 %v225, %v1348
        %v1350 = vand.u32 %v1349, 4294901760
        %v1351 = vsub.f32 %v1349, %v1350
        %v1352 = vand.u32 %v1351, 4294901760
        %1353 = vmatpush1.msra.mxu0 %v1352
        %v1354 = vand.u32 %v232, 4294901760
        %v1355 = vsub.f32 %v232, %v1354
        %v1356 = vand.u32 %v1355, 4294901760
        %v1357 = vsub.f32 %v1355, %v1356
        %v1358 = vand.u32 %v1357, 4294901760
        %1359 = vmatprep.subr.mxu0 %v1358
        %v1360 = vand.u32 %v231, 4294901760
        %v1361 = vsub.f32 %v231, %v1360
        %v1362 = vand.u32 %v1361, 4294901760
        %v1363 = vsub.f32 %v1361, %v1362
        %v1364 = vand.u32 %v1363, 4294901760
        %1365 = vmatpush1.msra.mxu0 %v1364
        %v1366 = vand.u32 %v238, 4294901760
        %v1367 = vsub.f32 %v238, %v1366
        %v1368 = vand.u32 %v1367, 4294901760
        %v1369 = vsub.f32 %v1367, %v1368
        %v1370 = vand.u32 %v1369, 4294901760
        %1371 = vmatprep.subr.mxu0 %v1370
        %v1372 = vand.u32 %v237, 4294901760
        %v1373 = vsub.f32 %v237, %v1372
        %v1374 = vand.u32 %v1373, 4294901760
        %v1375 = vsub.f32 %v1373, %v1374
        %v1376 = vand.u32 %v1375, 4294901760
        %1377 = vmatpush1.msra.mxu0 %v1376
        %v1378 = vand.u32 %v244, 4294901760
        %v1379 = vsub.f32 %v244, %v1378
        %v1380 = vand.u32 %v1379, 4294901760
        %v1381 = vsub.f32 %v1379, %v1380
        %v1382 = vand.u32 %v1381, 4294901760
        %1383 = vmatprep.subr.mxu0 %v1382
        %v1384 = vand.u32 %v243, 4294901760
        %v1385 = vsub.f32 %v243, %v1384
        %v1386 = vand.u32 %v1385, 4294901760
        %v1387 = vsub.f32 %v1385, %v1386
        %v1388 = vand.u32 %v1387, 4294901760
        %1389 = vmatpush1.msra.mxu0 %v1388
        %v1390 = vand.u32 %v250, 4294901760
        %v1391 = vsub.f32 %v250, %v1390
        %v1392 = vand.u32 %v1391, 4294901760
        %v1393 = vsub.f32 %v1391, %v1392
        %v1394 = vand.u32 %v1393, 4294901760
        %1395 = vmatprep.subr.mxu0 %v1394
        %v1396 = vand.u32 %v249, 4294901760
        %v1397 = vsub.f32 %v249, %v1396
        %v1398 = vand.u32 %v1397, 4294901760
        %v1399 = vsub.f32 %v1397, %v1398
        %v1400 = vand.u32 %v1399, 4294901760
        %1401 = vmatpush1.msra.mxu0 %v1400
        %v1402 = vand.u32 %v256, 4294901760
        %v1403 = vsub.f32 %v256, %v1402
        %v1404 = vand.u32 %v1403, 4294901760
        %v1405 = vsub.f32 %v1403, %v1404
        %v1406 = vand.u32 %v1405, 4294901760
        %1407 = vmatprep.subr.mxu0 %v1406
        %v1408 = vand.u32 %v255, 4294901760
        %v1409 = vsub.f32 %v255, %v1408
        %v1410 = vand.u32 %v1409, 4294901760
        %v1411 = vsub.f32 %v1409, %v1410
        %v1412 = vand.u32 %v1411, 4294901760
        %1413 = vmatpush1.msra.mxu0 %v1412
        %1414 = vmatprep.subr.mxu0 0.0
        %1415 = vmatpush1.msra.mxu0 0.0
        %1416 = vmatprep.subr.mxu0 0.0
        %1417 = vmatpush1.msra.mxu0 0.0
        %1418 = vmatprep.subr.mxu0 0.0
        %1419 = vmatpush1.msra.mxu0 0.0
        %1420 = vmatprep.subr.mxu0 0.0
        %1421 = vmatpush1.msra.mxu0 0.0
        %1422 = vmatprep.subr.mxu0 0.0
        %1423 = vmatpush1.msra.mxu0 0.0
        %1424 = vmatprep.subr.mxu0 0.0
        %1425 = vmatpush1.msra.mxu0 0.0
        %1426 = vmatprep.subr.mxu0 0.0
        %1427 = vmatpush1.msra.mxu0 0.0
        %1428 = vmatprep.subr.mxu0 0.0
        %1429 = vmatpush1.msra.mxu0 0.0
        %1430 = vmatprep.subr.mxu0 0.0
        %1431 = vmatpush1.msra.mxu0 0.0
        %1432 = vmatprep.subr.mxu0 0.0
        %1433 = vmatpush1.msra.mxu0 0.0
        %1434 = vmatprep.subr.mxu0 0.0
        %1435 = vmatpush1.msra.mxu0 0.0
        %1436 = vmatprep.subr.mxu0 0.0
        %1437 = vmatpush1.msra.mxu0 0.0
        %1438 = vmatprep.subr.mxu0 0.0
        %1439 = vmatpush1.msra.mxu0 0.0
        %1440 = vmatprep.subr.mxu0 0.0
        %1441 = vmatpush1.msra.mxu0 0.0
        %1442 = vmatprep.subr.mxu0 0.0
        %1443 = vmatpush1.msra.mxu0 0.0
        %1444 = vmatprep.subr.mxu0 0.0
        %1445 = vmatpush1.msra.mxu0 0.0
        %1446 = vmatprep.mubr.f32.mxu0 0.0
        %v1447 = vand.u32 %v162, 4294901760
        %1448 = vmatmul.mubr.f32.gmra.mrb[0].mxu0 %v1447
        %v1449 = vpop.f32.mrb[0].mxu0
        %v1450 = vadd.f32 %v1218, %v1449
        %v1451 = vpop.f32.mrb[0].mxu0
        %v1452 = vadd.f32 %v1220, %v1451
        %1453 = vdwg.mxu0
        %v1454 = vand.u32 %v166, 4294901760
        %v1455 = vsub.f32 %v166, %v1454
        %1456 = vmatprep.subr.mxu0 %v1455
        %v1457 = vand.u32 %v165, 4294901760
        %v1458 = vsub.f32 %v165, %v1457
        %1459 = vmatpush1.msra.mxu0 %v1458
        %v1460 = vand.u32 %v172, 4294901760
        %v1461 = vsub.f32 %v172, %v1460
        %1462 = vmatprep.subr.mxu0 %v1461
        %v1463 = vand.u32 %v171, 4294901760
        %v1464 = vsub.f32 %v171, %v1463
        %1465 = vmatpush1.msra.mxu0 %v1464
        %v1466 = vand.u32 %v178, 4294901760
        %v1467 = vsub.f32 %v178, %v1466
        %1468 = vmatprep.subr.mxu0 %v1467
        %v1469 = vand.u32 %v177, 4294901760
        %v1470 = vsub.f32 %v177, %v1469
        %1471 = vmatpush1.msra.mxu0 %v1470
        %v1472 = vand.u32 %v184, 4294901760
        %v1473 = vsub.f32 %v184, %v1472
        %1474 = vmatprep.subr.mxu0 %v1473
        %v1475 = vand.u32 %v183, 4294901760
        %v1476 = vsub.f32 %v183, %v1475
        %1477 = vmatpush1.msra.mxu0 %v1476
        %v1478 = vand.u32 %v190, 4294901760
        %v1479 = vsub.f32 %v190, %v1478
        %1480 = vmatprep.subr.mxu0 %v1479
        %v1481 = vand.u32 %v189, 4294901760
        %v1482 = vsub.f32 %v189, %v1481
        %1483 = vmatpush1.msra.mxu0 %v1482
        %v1484 = vand.u32 %v196, 4294901760
        %v1485 = vsub.f32 %v196, %v1484
        %1486 = vmatprep.subr.mxu0 %v1485
        %v1487 = vand.u32 %v195, 4294901760
        %v1488 = vsub.f32 %v195, %v1487
        %1489 = vmatpush1.msra.mxu0 %v1488
        %v1490 = vand.u32 %v202, 4294901760
        %v1491 = vsub.f32 %v202, %v1490
        %1492 = vmatprep.subr.mxu0 %v1491
        %v1493 = vand.u32 %v201, 4294901760
        %v1494 = vsub.f32 %v201, %v1493
        %1495 = vmatpush1.msra.mxu0 %v1494
        %v1496 = vand.u32 %v208, 4294901760
        %v1497 = vsub.f32 %v208, %v1496
        %1498 = vmatprep.subr.mxu0 %v1497
        %v1499 = vand.u32 %v207, 4294901760
        %v1500 = vsub.f32 %v207, %v1499
        %1501 = vmatpush1.msra.mxu0 %v1500
        %v1502 = vand.u32 %v214, 4294901760
        %v1503 = vsub.f32 %v214, %v1502
        %1504 = vmatprep.subr.mxu0 %v1503
        %v1505 = vand.u32 %v213, 4294901760
        %v1506 = vsub.f32 %v213, %v1505
        %1507 = vmatpush1.msra.mxu0 %v1506
        %v1508 = vand.u32 %v220, 4294901760
        %v1509 = vsub.f32 %v220, %v1508
        %1510 = vmatprep.subr.mxu0 %v1509
        %v1511 = vand.u32 %v219, 4294901760
        %v1512 = vsub.f32 %v219, %v1511
        %1513 = vmatpush1.msra.mxu0 %v1512
        %v1514 = vand.u32 %v226, 4294901760
        %v1515 = vsub.f32 %v226, %v1514
        %1516 = vmatprep.subr.mxu0 %v1515
        %v1517 = vand.u32 %v225, 4294901760
        %v1518 = vsub.f32 %v225, %v1517
        %1519 = vmatpush1.msra.mxu0 %v1518
        %v1520 = vand.u32 %v232, 4294901760
        %v1521 = vsub.f32 %v232, %v1520
        %1522 = vmatprep.subr.mxu0 %v1521
        %v1523 = vand.u32 %v231, 4294901760
        %v1524 = vsub.f32 %v231, %v1523
        %1525 = vmatpush1.msra.mxu0 %v1524
        %v1526 = vand.u32 %v238, 4294901760
        %v1527 = vsub.f32 %v238, %v1526
        %1528 = vmatprep.subr.mxu0 %v1527
        %v1529 = vand.u32 %v237, 4294901760
        %v1530 = vsub.f32 %v237, %v1529
        %1531 = vmatpush1.msra.mxu0 %v1530
        %v1532 = vand.u32 %v244, 4294901760
        %v1533 = vsub.f32 %v244, %v1532
        %1534 = vmatprep.subr.mxu0 %v1533
        %v1535 = vand.u32 %v243, 4294901760
        %v1536 = vsub.f32 %v243, %v1535
        %1537 = vmatpush1.msra.mxu0 %v1536
        %v1538 = vand.u32 %v250, 4294901760
        %v1539 = vsub.f32 %v250, %v1538
        %1540 = vmatprep.subr.mxu0 %v1539
        %v1541 = vand.u32 %v249, 4294901760
        %v1542 = vsub.f32 %v249, %v1541
        %1543 = vmatpush1.msra.mxu0 %v1542
        %v1544 = vand.u32 %v256, 4294901760
        %v1545 = vsub.f32 %v256, %v1544
        %1546 = vmatprep.subr.mxu0 %v1545
        %v1547 = vand.u32 %v255, 4294901760
        %v1548 = vsub.f32 %v255, %v1547
        %1549 = vmatpush1.msra.mxu0 %v1548
        %1550 = vmatprep.subr.mxu0 0.0
        %1551 = vmatpush1.msra.mxu0 0.0
        %1552 = vmatprep.subr.mxu0 0.0
        %1553 = vmatpush1.msra.mxu0 0.0
        %1554 = vmatprep.subr.mxu0 0.0
        %1555 = vmatpush1.msra.mxu0 0.0
        %1556 = vmatprep.subr.mxu0 0.0
        %1557 = vmatpush1.msra.mxu0 0.0
        %1558 = vmatprep.subr.mxu0 0.0
        %1559 = vmatpush1.msra.mxu0 0.0
        %1560 = vmatprep.subr.mxu0 0.0
        %1561 = vmatpush1.msra.mxu0 0.0
        %1562 = vmatprep.subr.mxu0 0.0
        %1563 = vmatpush1.msra.mxu0 0.0
        %1564 = vmatprep.subr.mxu0 0.0
        %1565 = vmatpush1.msra.mxu0 0.0
        %1566 = vmatprep.subr.mxu0 0.0
        %1567 = vmatpush1.msra.mxu0 0.0
        %1568 = vmatprep.subr.mxu0 0.0
        %1569 = vmatpush1.msra.mxu0 0.0
        %1570 = vmatprep.subr.mxu0 0.0
        %1571 = vmatpush1.msra.mxu0 0.0
        %1572 = vmatprep.subr.mxu0 0.0
        %1573 = vmatpush1.msra.mxu0 0.0
        %1574 = vmatprep.subr.mxu0 0.0
        %1575 = vmatpush1.msra.mxu0 0.0
        %1576 = vmatprep.subr.mxu0 0.0
        %1577 = vmatpush1.msra.mxu0 0.0
        %1578 = vmatprep.subr.mxu0 0.0
        %1579 = vmatpush1.msra.mxu0 0.0
        %1580 = vmatprep.subr.mxu0 0.0
        %1581 = vmatpush1.msra.mxu0 0.0
        %1582 = vmatprep.mubr.f32.mxu0 0.0
        %v1583 = vand.u32 %v162, 4294901760
        %v1584 = vsub.f32 %v162, %v1583
        %1585 = vmatmul.mubr.f32.gmra.mrb[0].mxu0 %v1584
        %v1586 = vpop.f32.mrb[0].mxu0
        %v1587 = vadd.f32 %v1450, %v1586
        %v1588 = vpop.f32.mrb[0].mxu0
        %v1589 = vadd.f32 %v1452, %v1588
        %1590 = vdwg.mxu0
        %v1591 = vand.u32 %v166, 4294901760
        %1592 = vmatprep.subr.mxu0 %v1591
        %v1593 = vand.u32 %v165, 4294901760
        %1594 = vmatpush1.msra.mxu0 %v1593
        %v1595 = vand.u32 %v172, 4294901760
        %1596 = vmatprep.subr.mxu0 %v1595
        %v1597 = vand.u32 %v171, 4294901760
        %1598 = vmatpush1.msra.mxu0 %v1597
        %v1599 = vand.u32 %v178, 4294901760
        %1600 = vmatprep.subr.mxu0 %v1599
        %v1601 = vand.u32 %v177, 4294901760
        %1602 = vmatpush1.msra.mxu0 %v1601
        %v1603 = vand.u32 %v184, 4294901760
        %1604 = vmatprep.subr.mxu0 %v1603
        %v1605 = vand.u32 %v183, 4294901760
        %1606 = vmatpush1.msra.mxu0 %v1605
        %v1607 = vand.u32 %v190, 4294901760
        %1608 = vmatprep.subr.mxu0 %v1607
        %v1609 = vand.u32 %v189, 4294901760
        %1610 = vmatpush1.msra.mxu0 %v1609
        %v1611 = vand.u32 %v196, 4294901760
        %1612 = vmatprep.subr.mxu0 %v1611
        %v1613 = vand.u32 %v195, 4294901760
        %1614 = vmatpush1.msra.mxu0 %v1613
        %v1615 = vand.u32 %v202, 4294901760
        %1616 = vmatprep.subr.mxu0 %v1615
        %v1617 = vand.u32 %v201, 4294901760
        %1618 = vmatpush1.msra.mxu0 %v1617
        %v1619 = vand.u32 %v208, 4294901760
        %1620 = vmatprep.subr.mxu0 %v1619
        %v1621 = vand.u32 %v207, 4294901760
        %1622 = vmatpush1.msra.mxu0 %v1621
        %v1623 = vand.u32 %v214, 4294901760
        %1624 = vmatprep.subr.mxu0 %v1623
        %v1625 = vand.u32 %v213, 4294901760
        %1626 = vmatpush1.msra.mxu0 %v1625
        %v1627 = vand.u32 %v220, 4294901760
        %1628 = vmatprep.subr.mxu0 %v1627
        %v1629 = vand.u32 %v219, 4294901760
        %1630 = vmatpush1.msra.mxu0 %v1629
        %v1631 = vand.u32 %v226, 4294901760
        %1632 = vmatprep.subr.mxu0 %v1631
        %v1633 = vand.u32 %v225, 4294901760
        %1634 = vmatpush1.msra.mxu0 %v1633
        %v1635 = vand.u32 %v232, 4294901760
        %1636 = vmatprep.subr.mxu0 %v1635
        %v1637 = vand.u32 %v231, 4294901760
        %1638 = vmatpush1.msra.mxu0 %v1637
        %v1639 = vand.u32 %v238, 4294901760
        %1640 = vmatprep.subr.mxu0 %v1639
        %v1641 = vand.u32 %v237, 4294901760
        %1642 = vmatpush1.msra.mxu0 %v1641
        %v1643 = vand.u32 %v244, 4294901760
        %1644 = vmatprep.subr.mxu0 %v1643
        %v1645 = vand.u32 %v243, 4294901760
        %1646 = vmatpush1.msra.mxu0 %v1645
        %v1647 = vand.u32 %v250, 4294901760
        %1648 = vmatprep.subr.mxu0 %v1647
        %v1649 = vand.u32 %v249, 4294901760
        %1650 = vmatpush1.msra.mxu0 %v1649
        %v1651 = vand.u32 %v256, 4294901760
        %1652 = vmatprep.subr.mxu0 %v1651
        %v1653 = vand.u32 %v255, 4294901760
        %1654 = vmatpush1.msra.mxu0 %v1653
        %1655 = vmatprep.subr.mxu0 0.0
        %1656 = vmatpush1.msra.mxu0 0.0
        %1657 = vmatprep.subr.mxu0 0.0
        %1658 = vmatpush1.msra.mxu0 0.0
        %1659 = vmatprep.subr.mxu0 0.0
        %1660 = vmatpush1.msra.mxu0 0.0
        %1661 = vmatprep.subr.mxu0 0.0
        %1662 = vmatpush1.msra.mxu0 0.0
        %1663 = vmatprep.subr.mxu0 0.0
        %1664 = vmatpush1.msra.mxu0 0.0
        %1665 = vmatprep.subr.mxu0 0.0
        %1666 = vmatpush1.msra.mxu0 0.0
        %1667 = vmatprep.subr.mxu0 0.0
        %1668 = vmatpush1.msra.mxu0 0.0
        %1669 = vmatprep.subr.mxu0 0.0
        %1670 = vmatpush1.msra.mxu0 0.0
        %1671 = vmatprep.subr.mxu0 0.0
        %1672 = vmatpush1.msra.mxu0 0.0
        %1673 = vmatprep.subr.mxu0 0.0
        %1674 = vmatpush1.msra.mxu0 0.0
        %1675 = vmatprep.subr.mxu0 0.0
        %1676 = vmatpush1.msra.mxu0 0.0
        %1677 = vmatprep.subr.mxu0 0.0
        %1678 = vmatpush1.msra.mxu0 0.0
        %1679 = vmatprep.subr.mxu0 0.0
        %1680 = vmatpush1.msra.mxu0 0.0
        %1681 = vmatprep.subr.mxu0 0.0
        %1682 = vmatpush1.msra.mxu0 0.0
        %1683 = vmatprep.subr.mxu0 0.0
        %1684 = vmatpush1.msra.mxu0 0.0
        %1685 = vmatprep.subr.mxu0 0.0
        %1686 = vmatpush1.msra.mxu0 0.0
        %1687 = vmatprep.mubr.f32.mxu0 0.0
        %v1688 = vand.u32 %v162, 4294901760
        %v1689 = vsub.f32 %v162, %v1688
        %v1690 = vand.u32 %v1689, 4294901760
        %1691 = vmatmul.mubr.f32.gmra.mrb[0].mxu0 %v1690
        %v1692 = vpop.f32.mrb[0].mxu0
        %v1693 = vadd.f32 %v1587, %v1692
        %v1694 = vpop.f32.mrb[0].mxu0
        %v1695 = vadd.f32 %v1589, %v1694
        %1696 = vdwg.mxu0
        %v1697 = vand.u32 %v166, 4294901760
        %v1698 = vsub.f32 %v166, %v1697
        %v1699 = vand.u32 %v1698, 4294901760
        %1700 = vmatprep.subr.mxu0 %v1699
        %v1701 = vand.u32 %v165, 4294901760
        %v1702 = vsub.f32 %v165, %v1701
        %v1703 = vand.u32 %v1702, 4294901760
        %1704 = vmatpush1.msra.mxu0 %v1703
        %v1705 = vand.u32 %v172, 4294901760
        %v1706 = vsub.f32 %v172, %v1705
        %v1707 = vand.u32 %v1706, 4294901760
        %1708 = vmatprep.subr.mxu0 %v1707
        %v1709 = vand.u32 %v171, 4294901760
        %v1710 = vsub.f32 %v171, %v1709
        %v1711 = vand.u32 %v1710, 4294901760
        %1712 = vmatpush1.msra.mxu0 %v1711
        %v1713 = vand.u32 %v178, 4294901760
        %v1714 = vsub.f32 %v178, %v1713
        %v1715 = vand.u32 %v1714, 4294901760
        %1716 = vmatprep.subr.mxu0 %v1715
        %v1717 = vand.u32 %v177, 4294901760
        %v1718 = vsub.f32 %v177, %v1717
        %v1719 = vand.u32 %v1718, 4294901760
        %1720 = vmatpush1.msra.mxu0 %v1719
        %v1721 = vand.u32 %v184, 4294901760
        %v1722 = vsub.f32 %v184, %v1721
        %v1723 = vand.u32 %v1722, 4294901760
        %1724 = vmatprep.subr.mxu0 %v1723
        %v1725 = vand.u32 %v183, 4294901760
        %v1726 = vsub.f32 %v183, %v1725
        %v1727 = vand.u32 %v1726, 4294901760
        %1728 = vmatpush1.msra.mxu0 %v1727
        %v1729 = vand.u32 %v190, 4294901760
        %v1730 = vsub.f32 %v190, %v1729
        %v1731 = vand.u32 %v1730, 4294901760
        %1732 = vmatprep.subr.mxu0 %v1731
        %v1733 = vand.u32 %v189, 4294901760
        %v1734 = vsub.f32 %v189, %v1733
        %v1735 = vand.u32 %v1734, 4294901760
        %1736 = vmatpush1.msra.mxu0 %v1735
        %v1737 = vand.u32 %v196, 4294901760
        %v1738 = vsub.f32 %v196, %v1737
        %v1739 = vand.u32 %v1738, 4294901760
        %1740 = vmatprep.subr.mxu0 %v1739
        %v1741 = vand.u32 %v195, 4294901760
        %v1742 = vsub.f32 %v195, %v1741
        %v1743 = vand.u32 %v1742, 4294901760
        %1744 = vmatpush1.msra.mxu0 %v1743
        %v1745 = vand.u32 %v202, 4294901760
        %v1746 = vsub.f32 %v202, %v1745
        %v1747 = vand.u32 %v1746, 4294901760
        %1748 = vmatprep.subr.mxu0 %v1747
        %v1749 = vand.u32 %v201, 4294901760
        %v1750 = vsub.f32 %v201, %v1749
        %v1751 = vand.u32 %v1750, 4294901760
        %1752 = vmatpush1.msra.mxu0 %v1751
        %v1753 = vand.u32 %v208, 4294901760
        %v1754 = vsub.f32 %v208, %v1753
        %v1755 = vand.u32 %v1754, 4294901760
        %1756 = vmatprep.subr.mxu0 %v1755
        %v1757 = vand.u32 %v207, 4294901760
        %v1758 = vsub.f32 %v207, %v1757
        %v1759 = vand.u32 %v1758, 4294901760
        %1760 = vmatpush1.msra.mxu0 %v1759
        %v1761 = vand.u32 %v214, 4294901760
        %v1762 = vsub.f32 %v214, %v1761
        %v1763 = vand.u32 %v1762, 4294901760
        %1764 = vmatprep.subr.mxu0 %v1763
        %v1765 = vand.u32 %v213, 4294901760
        %v1766 = vsub.f32 %v213, %v1765
        %v1767 = vand.u32 %v1766, 4294901760
        %1768 = vmatpush1.msra.mxu0 %v1767
        %v1769 = vand.u32 %v220, 4294901760
        %v1770 = vsub.f32 %v220, %v1769
        %v1771 = vand.u32 %v1770, 4294901760
        %1772 = vmatprep.subr.mxu0 %v1771
        %v1773 = vand.u32 %v219, 4294901760
        %v1774 = vsub.f32 %v219, %v1773
        %v1775 = vand.u32 %v1774, 4294901760
        %1776 = vmatpush1.msra.mxu0 %v1775
        %v1777 = vand.u32 %v226, 4294901760
        %v1778 = vsub.f32 %v226, %v1777
        %v1779 = vand.u32 %v1778, 4294901760
        %1780 = vmatprep.subr.mxu0 %v1779
        %v1781 = vand.u32 %v225, 4294901760
        %v1782 = vsub.f32 %v225, %v1781
        %v1783 = vand.u32 %v1782, 4294901760
        %1784 = vmatpush1.msra.mxu0 %v1783
        %v1785 = vand.u32 %v232, 4294901760
        %v1786 = vsub.f32 %v232, %v1785
        %v1787 = vand.u32 %v1786, 4294901760
        %1788 = vmatprep.subr.mxu0 %v1787
        %v1789 = vand.u32 %v231, 4294901760
        %v1790 = vsub.f32 %v231, %v1789
        %v1791 = vand.u32 %v1790, 4294901760
        %1792 = vmatpush1.msra.mxu0 %v1791
        %v1793 = vand.u32 %v238, 4294901760
        %v1794 = vsub.f32 %v238, %v1793
        %v1795 = vand.u32 %v1794, 4294901760
        %1796 = vmatprep.subr.mxu0 %v1795
        %v1797 = vand.u32 %v237, 4294901760
        %v1798 = vsub.f32 %v237, %v1797
        %v1799 = vand.u32 %v1798, 4294901760
        %1800 = vmatpush1.msra.mxu0 %v1799
        %v1801 = vand.u32 %v244, 4294901760
        %v1802 = vsub.f32 %v244, %v1801
        %v1803 = vand.u32 %v1802, 4294901760
        %1804 = vmatprep.subr.mxu0 %v1803
        %v1805 = vand.u32 %v243, 4294901760
        %v1806 = vsub.f32 %v243, %v1805
        %v1807 = vand.u32 %v1806, 4294901760
        %1808 = vmatpush1.msra.mxu0 %v1807
        %v1809 = vand.u32 %v250, 4294901760
        %v1810 = vsub.f32 %v250, %v1809
        %v1811 = vand.u32 %v1810, 4294901760
        %1812 = vmatprep.subr.mxu0 %v1811
        %v1813 = vand.u32 %v249, 4294901760
        %v1814 = vsub.f32 %v249, %v1813
        %v1815 = vand.u32 %v1814, 4294901760
        %1816 = vmatpush1.msra.mxu0 %v1815
        %v1817 = vand.u32 %v256, 4294901760
        %v1818 = vsub.f32 %v256, %v1817
        %v1819 = vand.u32 %v1818, 4294901760
        %1820 = vmatprep.subr.mxu0 %v1819
        %v1821 = vand.u32 %v255, 4294901760
        %v1822 = vsub.f32 %v255, %v1821
        %v1823 = vand.u32 %v1822, 4294901760
        %1824 = vmatpush1.msra.mxu0 %v1823
        %1825 = vmatprep.subr.mxu0 0.0
        %1826 = vmatpush1.msra.mxu0 0.0
        %1827 = vmatprep.subr.mxu0 0.0
        %1828 = vmatpush1.msra.mxu0 0.0
        %1829 = vmatprep.subr.mxu0 0.0
        %1830 = vmatpush1.msra.mxu0 0.0
        %1831 = vmatprep.subr.mxu0 0.0
        %1832 = vmatpush1.msra.mxu0 0.0
        %1833 = vmatprep.subr.mxu0 0.0
        %1834 = vmatpush1.msra.mxu0 0.0
        %1835 = vmatprep.subr.mxu0 0.0
        %1836 = vmatpush1.msra.mxu0 0.0
        %1837 = vmatprep.subr.mxu0 0.0
        %1838 = vmatpush1.msra.mxu0 0.0
        %1839 = vmatprep.subr.mxu0 0.0
        %1840 = vmatpush1.msra.mxu0 0.0
        %1841 = vmatprep.subr.mxu0 0.0
        %1842 = vmatpush1.msra.mxu0 0.0
        %1843 = vmatprep.subr.mxu0 0.0
        %1844 = vmatpush1.msra.mxu0 0.0
        %1845 = vmatprep.subr.mxu0 0.0
        %1846 = vmatpush1.msra.mxu0 0.0
        %1847 = vmatprep.subr.mxu0 0.0
        %1848 = vmatpush1.msra.mxu0 0.0
        %1849 = vmatprep.subr.mxu0 0.0
        %1850 = vmatpush1.msra.mxu0 0.0
        %1851 = vmatprep.subr.mxu0 0.0
        %1852 = vmatpush1.msra.mxu0 0.0
        %1853 = vmatprep.subr.mxu0 0.0
        %1854 = vmatpush1.msra.mxu0 0.0
        %1855 = vmatprep.subr.mxu0 0.0
        %1856 = vmatpush1.msra.mxu0 0.0
        %1857 = vmatprep.mubr.f32.mxu0 0.0
        %v1858 = vand.u32 %v162, 4294901760
        %1859 = vmatmul.mubr.f32.gmra.mrb[0].mxu0 %v1858
        %v1860 = vpop.f32.mrb[0].mxu0
        %v1861 = vadd.f32 %v1693, %v1860
        %v1862 = vpop.f32.mrb[0].mxu0
        %v1863 = vadd.f32 %v1695, %v1862
        %1864 = vdwg.mxu0
        %v1865 = vand.u32 %v166, 4294901760
        %1866 = vmatprep.subr.mxu0 %v1865
        %v1867 = vand.u32 %v165, 4294901760
        %1868 = vmatpush1.msra.mxu0 %v1867
        %v1869 = vand.u32 %v172, 4294901760
        %1870 = vmatprep.subr.mxu0 %v1869
        %v1871 = vand.u32 %v171, 4294901760
        %1872 = vmatpush1.msra.mxu0 %v1871
        %v1873 = vand.u32 %v178, 4294901760
        %1874 = vmatprep.subr.mxu0 %v1873
        %v1875 = vand.u32 %v177, 4294901760
        %1876 = vmatpush1.msra.mxu0 %v1875
        %v1877 = vand.u32 %v184, 4294901760
        %1878 = vmatprep.subr.mxu0 %v1877
        %v1879 = vand.u32 %v183, 4294901760
        %1880 = vmatpush1.msra.mxu0 %v1879
        %v1881 = vand.u32 %v190, 4294901760
        %1882 = vmatprep.subr.mxu0 %v1881
        %v1883 = vand.u32 %v189, 4294901760
        %1884 = vmatpush1.msra.mxu0 %v1883
        %v1885 = vand.u32 %v196, 4294901760
        %1886 = vmatprep.subr.mxu0 %v1885
        %v1887 = vand.u32 %v195, 4294901760
        %1888 = vmatpush1.msra.mxu0 %v1887
        %v1889 = vand.u32 %v202, 4294901760
        %1890 = vmatprep.subr.mxu0 %v1889
        %v1891 = vand.u32 %v201, 4294901760
        %1892 = vmatpush1.msra.mxu0 %v1891
        %v1893 = vand.u32 %v208, 4294901760
        %1894 = vmatprep.subr.mxu0 %v1893
        %v1895 = vand.u32 %v207, 4294901760
        %1896 = vmatpush1.msra.mxu0 %v1895
        %v1897 = vand.u32 %v214, 4294901760
        %1898 = vmatprep.subr.mxu0 %v1897
        %v1899 = vand.u32 %v213, 4294901760
        %1900 = vmatpush1.msra.mxu0 %v1899
        %v1901 = vand.u32 %v220, 4294901760
        %1902 = vmatprep.subr.mxu0 %v1901
        %v1903 = vand.u32 %v219, 4294901760
        %1904 = vmatpush1.msra.mxu0 %v1903
        %v1905 = vand.u32 %v226, 4294901760
        %1906 = vmatprep.subr.mxu0 %v1905
        %v1907 = vand.u32 %v225, 4294901760
        %1908 = vmatpush1.msra.mxu0 %v1907
        %v1909 = vand.u32 %v232, 4294901760
        %1910 = vmatprep.subr.mxu0 %v1909
        %v1911 = vand.u32 %v231, 4294901760
        %1912 = vmatpush1.msra.mxu0 %v1911
        %v1913 = vand.u32 %v238, 4294901760
        %1914 = vmatprep.subr.mxu0 %v1913
        %v1915 = vand.u32 %v237, 4294901760
        %1916 = vmatpush1.msra.mxu0 %v1915
        %v1917 = vand.u32 %v244, 4294901760
        %1918 = vmatprep.subr.mxu0 %v1917
        %v1919 = vand.u32 %v243, 4294901760
        %1920 = vmatpush1.msra.mxu0 %v1919
        %v1921 = vand.u32 %v250, 4294901760
        %1922 = vmatprep.subr.mxu0 %v1921
        %v1923 = vand.u32 %v249, 4294901760
        %1924 = vmatpush1.msra.mxu0 %v1923
        %v1925 = vand.u32 %v256, 4294901760
        %1926 = vmatprep.subr.mxu0 %v1925
        %v1927 = vand.u32 %v255, 4294901760
        %1928 = vmatpush1.msra.mxu0 %v1927
        %1929 = vmatprep.subr.mxu0 0.0
        %1930 = vmatpush1.msra.mxu0 0.0
        %1931 = vmatprep.subr.mxu0 0.0
        %1932 = vmatpush1.msra.mxu0 0.0
        %1933 = vmatprep.subr.mxu0 0.0
        %1934 = vmatpush1.msra.mxu0 0.0
        %1935 = vmatprep.subr.mxu0 0.0
        %1936 = vmatpush1.msra.mxu0 0.0
        %1937 = vmatprep.subr.mxu0 0.0
        %1938 = vmatpush1.msra.mxu0 0.0
        %1939 = vmatprep.subr.mxu0 0.0
        %1940 = vmatpush1.msra.mxu0 0.0
        %1941 = vmatprep.subr.mxu0 0.0
        %1942 = vmatpush1.msra.mxu0 0.0
        %1943 = vmatprep.subr.mxu0 0.0
        %1944 = vmatpush1.msra.mxu0 0.0
        %1945 = vmatprep.subr.mxu0 0.0
        %1946 = vmatpush1.msra.mxu0 0.0
        %1947 = vmatprep.subr.mxu0 0.0
        %1948 = vmatpush1.msra.mxu0 0.0
        %1949 = vmatprep.subr.mxu0 0.0
        %1950 = vmatpush1.msra.mxu0 0.0
        %1951 = vmatprep.subr.mxu0 0.0
        %1952 = vmatpush1.msra.mxu0 0.0
        %1953 = vmatprep.subr.mxu0 0.0
        %1954 = vmatpush1.msra.mxu0 0.0
        %1955 = vmatprep.subr.mxu0 0.0
        %1956 = vmatpush1.msra.mxu0 0.0
        %1957 = vmatprep.subr.mxu0 0.0
        %1958 = vmatpush1.msra.mxu0 0.0
        %1959 = vmatprep.subr.mxu0 0.0
        %1960 = vmatpush1.msra.mxu0 0.0
        %1961 = vmatprep.mubr.f32.mxu0 0.0
        %v1962 = vand.u32 %v162, 4294901760
        %1963 = vmatmul.mubr.f32.gmra.mrb[0].mxu0 %v1962
        %v1964 = vpop.f32.mrb[0].mxu0
        %v1965 = vadd.f32 %v1861, %v1964
        %v1966 = vpop.f32.mrb[0].mxu0
        %v1967 = vadd.f32 %v1863, %v1966
        %1968 = vdwg.mxu0
        %v1969 = vand.u32 %v168, 4294901760
        %1970 = vmatprep.subr.mxu0 %v1969
        %v1971 = vand.u32 %v167, 4294901760
        %1972 = vmatpush1.msra.mxu0 %v1971
        %v1973 = vand.u32 %v174, 4294901760
        %1974 = vmatprep.subr.mxu0 %v1973
        %v1975 = vand.u32 %v173, 4294901760
        %1976 = vmatpush1.msra.mxu0 %v1975
        %v1977 = vand.u32 %v180, 4294901760
        %1978 = vmatprep.subr.mxu0 %v1977
        %v1979 = vand.u32 %v179, 4294901760
        %1980 = vmatpush1.msra.mxu0 %v1979
        %v1981 = vand.u32 %v186, 4294901760
        %1982 = vmatprep.subr.mxu0 %v1981
        %v1983 = vand.u32 %v185, 4294901760
        %1984 = vmatpush1.msra.mxu0 %v1983
        %v1985 = vand.u32 %v192, 4294901760
        %1986 = vmatprep.subr.mxu0 %v1985
        %v1987 = vand.u32 %v191, 4294901760
        %1988 = vmatpush1.msra.mxu0 %v1987
        %v1989 = vand.u32 %v198, 4294901760
        %1990 = vmatprep.subr.mxu0 %v1989
        %v1991 = vand.u32 %v197, 4294901760
        %1992 = vmatpush1.msra.mxu0 %v1991
        %v1993 = vand.u32 %v204, 4294901760
        %1994 = vmatprep.subr.mxu0 %v1993
        %v1995 = vand.u32 %v203, 4294901760
        %1996 = vmatpush1.msra.mxu0 %v1995
        %v1997 = vand.u32 %v210, 4294901760
        %1998 = vmatprep.subr.mxu0 %v1997
        %v1999 = vand.u32 %v209, 4294901760
        %2000 = vmatpush1.msra.mxu0 %v1999
        %v2001 = vand.u32 %v216, 4294901760
        %2002 = vmatprep.subr.mxu0 %v2001
        %v2003 = vand.u32 %v215, 4294901760
        %2004 = vmatpush1.msra.mxu0 %v2003
        %v2005 = vand.u32 %v222, 4294901760
        %2006 = vmatprep.subr.mxu0 %v2005
        %v2007 = vand.u32 %v221, 4294901760
        %2008 = vmatpush1.msra.mxu0 %v2007
        %v2009 = vand.u32 %v228, 4294901760
        %2010 = vmatprep.subr.mxu0 %v2009
        %v2011 = vand.u32 %v227, 4294901760
        %2012 = vmatpush1.msra.mxu0 %v2011
        %v2013 = vand.u32 %v234, 4294901760
        %2014 = vmatprep.subr.mxu0 %v2013
        %v2015 = vand.u32 %v233, 4294901760
        %2016 = vmatpush1.msra.mxu0 %v2015
        %v2017 = vand.u32 %v240, 4294901760
        %2018 = vmatprep.subr.mxu0 %v2017
        %v2019 = vand.u32 %v239, 4294901760
        %2020 = vmatpush1.msra.mxu0 %v2019
        %v2021 = vand.u32 %v246, 4294901760
        %2022 = vmatprep.subr.mxu0 %v2021
        %v2023 = vand.u32 %v245, 4294901760
        %2024 = vmatpush1.msra.mxu0 %v2023
        %v2025 = vand.u32 %v252, 4294901760
        %2026 = vmatprep.subr.mxu0 %v2025
        %v2027 = vand.u32 %v251, 4294901760
        %2028 = vmatpush1.msra.mxu0 %v2027
        %v2029 = vand.u32 %v258, 4294901760
        %2030 = vmatprep.subr.mxu0 %v2029
        %v2031 = vand.u32 %v257, 4294901760
        %2032 = vmatpush1.msra.mxu0 %v2031
        %2033 = vmatprep.subr.mxu0 0.0
        %2034 = vmatpush1.msra.mxu0 0.0
        %2035 = vmatprep.subr.mxu0 0.0
        %2036 = vmatpush1.msra.mxu0 0.0
        %2037 = vmatprep.subr.mxu0 0.0
        %2038 = vmatpush1.msra.mxu0 0.0
        %2039 = vmatprep.subr.mxu0 0.0
        %2040 = vmatpush1.msra.mxu0 0.0
        %2041 = vmatprep.subr.mxu0 0.0
        %2042 = vmatpush1.msra.mxu0 0.0
        %2043 = vmatprep.subr.mxu0 0.0
        %2044 = vmatpush1.msra.mxu0 0.0
        %2045 = vmatprep.subr.mxu0 0.0
        %2046 = vmatpush1.msra.mxu0 0.0
        %2047 = vmatprep.subr.mxu0 0.0
        %2048 = vmatpush1.msra.mxu0 0.0
        %2049 = vmatprep.subr.mxu0 0.0
        %2050 = vmatpush1.msra.mxu0 0.0
        %2051 = vmatprep.subr.mxu0 0.0
        %2052 = vmatpush1.msra.mxu0 0.0
        %2053 = vmatprep.subr.mxu0 0.0
        %2054 = vmatpush1.msra.mxu0 0.0
        %2055 = vmatprep.subr.mxu0 0.0
        %2056 = vmatpush1.msra.mxu0 0.0
        %2057 = vmatprep.subr.mxu0 0.0
        %2058 = vmatpush1.msra.mxu0 0.0
        %2059 = vmatprep.subr.mxu0 0.0
        %2060 = vmatpush1.msra.mxu0 0.0
        %2061 = vmatprep.subr.mxu0 0.0
        %2062 = vmatpush1.msra.mxu0 0.0
        %2063 = vmatprep.subr.mxu0 0.0
        %2064 = vmatpush1.msra.mxu0 0.0
        %2065 = vmatprep.mubr.f32.mxu0 0.0
        %v2066 = vand.u32 %v162, 4294901760
        %v2067 = vsub.f32 %v162, %v2066
        %v2068 = vand.u32 %v2067, 4294901760
        %v2069 = vsub.f32 %v2067, %v2068
        %v2070 = vand.u32 %v2069, 4294901760
        %2071 = vmatmul.mubr.f32.gmra.mrb[0].mxu0 %v2070
        %v2072 = vpop.f32.mrb[0].mxu0
        %v2073 = vadd.f32 0.0, %v2072
        %v2074 = vpop.f32.mrb[0].mxu0
        %v2075 = vadd.f32 0.0, %v2074
        %2076 = vdwg.mxu0
        %v2077 = vand.u32 %v168, 4294901760
        %v2078 = vsub.f32 %v168, %v2077
        %v2079 = vand.u32 %v2078, 4294901760
        %v2080 = vsub.f32 %v2078, %v2079
        %v2081 = vand.u32 %v2080, 4294901760
        %2082 = vmatprep.subr.mxu0 %v2081
        %v2083 = vand.u32 %v167, 4294901760
        %v2084 = vsub.f32 %v167, %v2083
        %v2085 = vand.u32 %v2084, 4294901760
        %v2086 = vsub.f32 %v2084, %v2085
        %v2087 = vand.u32 %v2086, 4294901760
        %2088 = vmatpush1.msra.mxu0 %v2087
        %v2089 = vand.u32 %v174, 4294901760
        %v2090 = vsub.f32 %v174, %v2089
        %v2091 = vand.u32 %v2090, 4294901760
        %v2092 = vsub.f32 %v2090, %v2091
        %v2093 = vand.u32 %v2092, 4294901760
        %2094 = vmatprep.subr.mxu0 %v2093
        %v2095 = vand.u32 %v173, 4294901760
        %v2096 = vsub.f32 %v173, %v2095
        %v2097 = vand.u32 %v2096, 4294901760
        %v2098 = vsub.f32 %v2096, %v2097
        %v2099 = vand.u32 %v2098, 4294901760
        %2100 = vmatpush1.msra.mxu0 %v2099
        %v2101 = vand.u32 %v180, 4294901760
        %v2102 = vsub.f32 %v180, %v2101
        %v2103 = vand.u32 %v2102, 4294901760
        %v2104 = vsub.f32 %v2102, %v2103
        %v2105 = vand.u32 %v2104, 4294901760
        %2106 = vmatprep.subr.mxu0 %v2105
        %v2107 = vand.u32 %v179, 4294901760
        %v2108 = vsub.f32 %v179, %v2107
        %v2109 = vand.u32 %v2108, 4294901760
        %v2110 = vsub.f32 %v2108, %v2109
        %v2111 = vand.u32 %v2110, 4294901760
        %2112 = vmatpush1.msra.mxu0 %v2111
        %v2113 = vand.u32 %v186, 4294901760
        %v2114 = vsub.f32 %v186, %v2113
        %v2115 = vand.u32 %v2114, 4294901760
        %v2116 = vsub.f32 %v2114, %v2115
        %v2117 = vand.u32 %v2116, 4294901760
        %2118 = vmatprep.subr.mxu0 %v2117
        %v2119 = vand.u32 %v185, 4294901760
        %v2120 = vsub.f32 %v185, %v2119
        %v2121 = vand.u32 %v2120, 4294901760
        %v2122 = vsub.f32 %v2120, %v2121
        %v2123 = vand.u32 %v2122, 4294901760
        %2124 = vmatpush1.msra.mxu0 %v2123
        %v2125 = vand.u32 %v192, 4294901760
        %v2126 = vsub.f32 %v192, %v2125
        %v2127 = vand.u32 %v2126, 4294901760
        %v2128 = vsub.f32 %v2126, %v2127
        %v2129 = vand.u32 %v2128, 4294901760
        %2130 = vmatprep.subr.mxu0 %v2129
        %v2131 = vand.u32 %v191, 4294901760
        %v2132 = vsub.f32 %v191, %v2131
        %v2133 = vand.u32 %v2132, 4294901760
        %v2134 = vsub.f32 %v2132, %v2133
        %v2135 = vand.u32 %v2134, 4294901760
        %2136 = vmatpush1.msra.mxu0 %v2135
        %v2137 = vand.u32 %v198, 4294901760
        %v2138 = vsub.f32 %v198, %v2137
        %v2139 = vand.u32 %v2138, 4294901760
        %v2140 = vsub.f32 %v2138, %v2139
        %v2141 = vand.u32 %v2140, 4294901760
        %2142 = vmatprep.subr.mxu0 %v2141
        %v2143 = vand.u32 %v197, 4294901760
        %v2144 = vsub.f32 %v197, %v2143
        %v2145 = vand.u32 %v2144, 4294901760
        %v2146 = vsub.f32 %v2144, %v2145
        %v2147 = vand.u32 %v2146, 4294901760
        %2148 = vmatpush1.msra.mxu0 %v2147
        %v2149 = vand.u32 %v204, 4294901760
        %v2150 = vsub.f32 %v204, %v2149
        %v2151 = vand.u32 %v2150, 4294901760
        %v2152 = vsub.f32 %v2150, %v2151
        %v2153 = vand.u32 %v2152, 4294901760
        %2154 = vmatprep.subr.mxu0 %v2153
        %v2155 = vand.u32 %v203, 4294901760
        %v2156 = vsub.f32 %v203, %v2155
        %v2157 = vand.u32 %v2156, 4294901760
        %v2158 = vsub.f32 %v2156, %v2157
        %v2159 = vand.u32 %v2158, 4294901760
        %2160 = vmatpush1.msra.mxu0 %v2159
        %v2161 = vand.u32 %v210, 4294901760
        %v2162 = vsub.f32 %v210, %v2161
        %v2163 = vand.u32 %v2162, 4294901760
        %v2164 = vsub.f32 %v2162, %v2163
        %v2165 = vand.u32 %v2164, 4294901760
        %2166 = vmatprep.subr.mxu0 %v2165
        %v2167 = vand.u32 %v209, 4294901760
        %v2168 = vsub.f32 %v209, %v2167
        %v2169 = vand.u32 %v2168, 4294901760
        %v2170 = vsub.f32 %v2168, %v2169
        %v2171 = vand.u32 %v2170, 4294901760
        %2172 = vmatpush1.msra.mxu0 %v2171
        %v2173 = vand.u32 %v216, 4294901760
        %v2174 = vsub.f32 %v216, %v2173
        %v2175 = vand.u32 %v2174, 4294901760
        %v2176 = vsub.f32 %v2174, %v2175
        %v2177 = vand.u32 %v2176, 4294901760
        %2178 = vmatprep.subr.mxu0 %v2177
        %v2179 = vand.u32 %v215, 4294901760
        %v2180 = vsub.f32 %v215, %v2179
        %v2181 = vand.u32 %v2180, 4294901760
        %v2182 = vsub.f32 %v2180, %v2181
        %v2183 = vand.u32 %v2182, 4294901760
        %2184 = vmatpush1.msra.mxu0 %v2183
        %v2185 = vand.u32 %v222, 4294901760
        %v2186 = vsub.f32 %v222, %v2185
        %v2187 = vand.u32 %v2186, 4294901760
        %v2188 = vsub.f32 %v2186, %v2187
        %v2189 = vand.u32 %v2188, 4294901760
        %2190 = vmatprep.subr.mxu0 %v2189
        %v2191 = vand.u32 %v221, 4294901760
        %v2192 = vsub.f32 %v221, %v2191
        %v2193 = vand.u32 %v2192, 4294901760
        %v2194 = vsub.f32 %v2192, %v2193
        %v2195 = vand.u32 %v2194, 4294901760
        %2196 = vmatpush1.msra.mxu0 %v2195
        %v2197 = vand.u32 %v228, 4294901760
        %v2198 = vsub.f32 %v228, %v2197
        %v2199 = vand.u32 %v2198, 4294901760
        %v2200 = vsub.f32 %v2198, %v2199
        %v2201 = vand.u32 %v2200, 4294901760
        %2202 = vmatprep.subr.mxu0 %v2201
        %v2203 = vand.u32 %v227, 4294901760
        %v2204 = vsub.f32 %v227, %v2203
        %v2205 = vand.u32 %v2204, 4294901760
        %v2206 = vsub.f32 %v2204, %v2205
        %v2207 = vand.u32 %v2206, 4294901760
        %2208 = vmatpush1.msra.mxu0 %v2207
        %v2209 = vand.u32 %v234, 4294901760
        %v2210 = vsub.f32 %v234, %v2209
        %v2211 = vand.u32 %v2210, 4294901760
        %v2212 = vsub.f32 %v2210, %v2211
        %v2213 = vand.u32 %v2212, 4294901760
        %2214 = vmatprep.subr.mxu0 %v2213
        %v2215 = vand.u32 %v233, 4294901760
        %v2216 = vsub.f32 %v233, %v2215
        %v2217 = vand.u32 %v2216, 4294901760
        %v2218 = vsub.f32 %v2216, %v2217
        %v2219 = vand.u32 %v2218, 4294901760
        %2220 = vmatpush1.msra.mxu0 %v2219
        %v2221 = vand.u32 %v240, 4294901760
        %v2222 = vsub.f32 %v240, %v2221
        %v2223 = vand.u32 %v2222, 4294901760
        %v2224 = vsub.f32 %v2222, %v2223
        %v2225 = vand.u32 %v2224, 4294901760
        %2226 = vmatprep.subr.mxu0 %v2225
        %v2227 = vand.u32 %v239, 4294901760
        %v2228 = vsub.f32 %v239, %v2227
        %v2229 = vand.u32 %v2228, 4294901760
        %v2230 = vsub.f32 %v2228, %v2229
        %v2231 = vand.u32 %v2230, 4294901760
        %2232 = vmatpush1.msra.mxu0 %v2231
        %v2233 = vand.u32 %v246, 4294901760
        %v2234 = vsub.f32 %v246, %v2233
        %v2235 = vand.u32 %v2234, 4294901760
        %v2236 = vsub.f32 %v2234, %v2235
        %v2237 = vand.u32 %v2236, 4294901760
        %2238 = vmatprep.subr.mxu0 %v2237
        %v2239 = vand.u32 %v245, 4294901760
        %v2240 = vsub.f32 %v245, %v2239
        %v2241 = vand.u32 %v2240, 4294901760
        %v2242 = vsub.f32 %v2240, %v2241
        %v2243 = vand.u32 %v2242, 4294901760
        %2244 = vmatpush1.msra.mxu0 %v2243
        %v2245 = vand.u32 %v252, 4294901760
        %v2246 = vsub.f32 %v252, %v2245
        %v2247 = vand.u32 %v2246, 4294901760
        %v2248 = vsub.f32 %v2246, %v2247
        %v2249 = vand.u32 %v2248, 4294901760
        %2250 = vmatprep.subr.mxu0 %v2249
        %v2251 = vand.u32 %v251, 4294901760
        %v2252 = vsub.f32 %v251, %v2251
        %v2253 = vand.u32 %v2252, 4294901760
        %v2254 = vsub.f32 %v2252, %v2253
        %v2255 = vand.u32 %v2254, 4294901760
        %2256 = vmatpush1.msra.mxu0 %v2255
        %v2257 = vand.u32 %v258, 4294901760
        %v2258 = vsub.f32 %v258, %v2257
        %v2259 = vand.u32 %v2258, 4294901760
        %v2260 = vsub.f32 %v2258, %v2259
        %v2261 = vand.u32 %v2260, 4294901760
        %2262 = vmatprep.subr.mxu0 %v2261
        %v2263 = vand.u32 %v257, 4294901760
        %v2264 = vsub.f32 %v257, %v2263
        %v2265 = vand.u32 %v2264, 4294901760
        %v2266 = vsub.f32 %v2264, %v2265
        %v2267 = vand.u32 %v2266, 4294901760
        %2268 = vmatpush1.msra.mxu0 %v2267
        %2269 = vmatprep.subr.mxu0 0.0
        %2270 = vmatpush1.msra.mxu0 0.0
        %2271 = vmatprep.subr.mxu0 0.0
        %2272 = vmatpush1.msra.mxu0 0.0
        %2273 = vmatprep.subr.mxu0 0.0
        %2274 = vmatpush1.msra.mxu0 0.0
        %2275 = vmatprep.subr.mxu0 0.0
        %2276 = vmatpush1.msra.mxu0 0.0
        %2277 = vmatprep.subr.mxu0 0.0
        %2278 = vmatpush1.msra.mxu0 0.0
        %2279 = vmatprep.subr.mxu0 0.0
        %2280 = vmatpush1.msra.mxu0 0.0
        %2281 = vmatprep.subr.mxu0 0.0
        %2282 = vmatpush1.msra.mxu0 0.0
        %2283 = vmatprep.subr.mxu0 0.0
        %2284 = vmatpush1.msra.mxu0 0.0
        %2285 = vmatprep.subr.mxu0 0.0
        %2286 = vmatpush1.msra.mxu0 0.0
        %2287 = vmatprep.subr.mxu0 0.0
        %2288 = vmatpush1.msra.mxu0 0.0
        %2289 = vmatprep.subr.mxu0 0.0
        %2290 = vmatpush1.msra.mxu0 0.0
        %2291 = vmatprep.subr.mxu0 0.0
        %2292 = vmatpush1.msra.mxu0 0.0
        %2293 = vmatprep.subr.mxu0 0.0
        %2294 = vmatpush1.msra.mxu0 0.0
        %2295 = vmatprep.subr.mxu0 0.0
        %2296 = vmatpush1.msra.mxu0 0.0
        %2297 = vmatprep.subr.mxu0 0.0
        %2298 = vmatpush1.msra.mxu0 0.0
        %2299 = vmatprep.subr.mxu0 0.0
        %2300 = vmatpush1.msra.mxu0 0.0
        %2301 = vmatprep.mubr.f32.mxu0 0.0
        %v2302 = vand.u32 %v162, 4294901760
        %2303 = vmatmul.mubr.f32.gmra.mrb[0].mxu0 %v2302
        %v2304 = vpop.f32.mrb[0].mxu0
        %v2305 = vadd.f32 %v2073, %v2304
        %v2306 = vpop.f32.mrb[0].mxu0
        %v2307 = vadd.f32 %v2075, %v2306
        %2308 = vdwg.mxu0
        %v2309 = vand.u32 %v168, 4294901760
        %v2310 = vsub.f32 %v168, %v2309
        %2311 = vmatprep.subr.mxu0 %v2310
        %v2312 = vand.u32 %v167, 4294901760
        %v2313 = vsub.f32 %v167, %v2312
        %2314 = vmatpush1.msra.mxu0 %v2313
        %v2315 = vand.u32 %v174, 4294901760
        %v2316 = vsub.f32 %v174, %v2315
        %2317 = vmatprep.subr.mxu0 %v2316
        %v2318 = vand.u32 %v173, 4294901760
        %v2319 = vsub.f32 %v173, %v2318
        %2320 = vmatpush1.msra.mxu0 %v2319
        %v2321 = vand.u32 %v180, 4294901760
        %v2322 = vsub.f32 %v180, %v2321
        %2323 = vmatprep.subr.mxu0 %v2322
        %v2324 = vand.u32 %v179, 4294901760
        %v2325 = vsub.f32 %v179, %v2324
        %2326 = vmatpush1.msra.mxu0 %v2325
        %v2327 = vand.u32 %v186, 4294901760
        %v2328 = vsub.f32 %v186, %v2327
        %2329 = vmatprep.subr.mxu0 %v2328
        %v2330 = vand.u32 %v185, 4294901760
        %v2331 = vsub.f32 %v185, %v2330
        %2332 = vmatpush1.msra.mxu0 %v2331
        %v2333 = vand.u32 %v192, 4294901760
        %v2334 = vsub.f32 %v192, %v2333
        %2335 = vmatprep.subr.mxu0 %v2334
        %v2336 = vand.u32 %v191, 4294901760
        %v2337 = vsub.f32 %v191, %v2336
        %2338 = vmatpush1.msra.mxu0 %v2337
        %v2339 = vand.u32 %v198, 4294901760
        %v2340 = vsub.f32 %v198, %v2339
        %2341 = vmatprep.subr.mxu0 %v2340
        %v2342 = vand.u32 %v197, 4294901760
        %v2343 = vsub.f32 %v197, %v2342
        %2344 = vmatpush1.msra.mxu0 %v2343
        %v2345 = vand.u32 %v204, 4294901760
        %v2346 = vsub.f32 %v204, %v2345
        %2347 = vmatprep.subr.mxu0 %v2346
        %v2348 = vand.u32 %v203, 4294901760
        %v2349 = vsub.f32 %v203, %v2348
        %2350 = vmatpush1.msra.mxu0 %v2349
        %v2351 = vand.u32 %v210, 4294901760
        %v2352 = vsub.f32 %v210, %v2351
        %2353 = vmatprep.subr.mxu0 %v2352
        %v2354 = vand.u32 %v209, 4294901760
        %v2355 = vsub.f32 %v209, %v2354
        %2356 = vmatpush1.msra.mxu0 %v2355
        %v2357 = vand.u32 %v216, 4294901760
        %v2358 = vsub.f32 %v216, %v2357
        %2359 = vmatprep.subr.mxu0 %v2358
        %v2360 = vand.u32 %v215, 4294901760
        %v2361 = vsub.f32 %v215, %v2360
        %2362 = vmatpush1.msra.mxu0 %v2361
        %v2363 = vand.u32 %v222, 4294901760
        %v2364 = vsub.f32 %v222, %v2363
        %2365 = vmatprep.subr.mxu0 %v2364
        %v2366 = vand.u32 %v221, 4294901760
        %v2367 = vsub.f32 %v221, %v2366
        %2368 = vmatpush1.msra.mxu0 %v2367
        %v2369 = vand.u32 %v228, 4294901760
        %v2370 = vsub.f32 %v228, %v2369
        %2371 = vmatprep.subr.mxu0 %v2370
        %v2372 = vand.u32 %v227, 4294901760
        %v2373 = vsub.f32 %v227, %v2372
        %2374 = vmatpush1.msra.mxu0 %v2373
        %v2375 = vand.u32 %v234, 4294901760
        %v2376 = vsub.f32 %v234, %v2375
        %2377 = vmatprep.subr.mxu0 %v2376
        %v2378 = vand.u32 %v233, 4294901760
        %v2379 = vsub.f32 %v233, %v2378
        %2380 = vmatpush1.msra.mxu0 %v2379
        %v2381 = vand.u32 %v240, 4294901760
        %v2382 = vsub.f32 %v240, %v2381
        %2383 = vmatprep.subr.mxu0 %v2382
        %v2384 = vand.u32 %v239, 4294901760
        %v2385 = vsub.f32 %v239, %v2384
        %2386 = vmatpush1.msra.mxu0 %v2385
        %v2387 = vand.u32 %v246, 4294901760
        %v2388 = vsub.f32 %v246, %v2387
        %2389 = vmatprep.subr.mxu0 %v2388
        %v2390 = vand.u32 %v245, 4294901760
        %v2391 = vsub.f32 %v245, %v2390
        %2392 = vmatpush1.msra.mxu0 %v2391
        %v2393 = vand.u32 %v252, 4294901760
        %v2394 = vsub.f32 %v252, %v2393
        %2395 = vmatprep.subr.mxu0 %v2394
        %v2396 = vand.u32 %v251, 4294901760
        %v2397 = vsub.f32 %v251, %v2396
        %2398 = vmatpush1.msra.mxu0 %v2397
        %v2399 = vand.u32 %v258, 4294901760
        %v2400 = vsub.f32 %v258, %v2399
        %2401 = vmatprep.subr.mxu0 %v2400
        %v2402 = vand.u32 %v257, 4294901760
        %v2403 = vsub.f32 %v257, %v2402
        %2404 = vmatpush1.msra.mxu0 %v2403
        %2405 = vmatprep.subr.mxu0 0.0
        %2406 = vmatpush1.msra.mxu0 0.0
        %2407 = vmatprep.subr.mxu0 0.0
        %2408 = vmatpush1.msra.mxu0 0.0
        %2409 = vmatprep.subr.mxu0 0.0
        %2410 = vmatpush1.msra.mxu0 0.0
        %2411 = vmatprep.subr.mxu0 0.0
        %2412 = vmatpush1.msra.mxu0 0.0
        %2413 = vmatprep.subr.mxu0 0.0
        %2414 = vmatpush1.msra.mxu0 0.0
        %2415 = vmatprep.subr.mxu0 0.0
        %2416 = vmatpush1.msra.mxu0 0.0
        %2417 = vmatprep.subr.mxu0 0.0
        %2418 = vmatpush1.msra.mxu0 0.0
        %2419 = vmatprep.subr.mxu0 0.0
        %2420 = vmatpush1.msra.mxu0 0.0
        %2421 = vmatprep.subr.mxu0 0.0
        %2422 = vmatpush1.msra.mxu0 0.0
        %2423 = vmatprep.subr.mxu0 0.0
        %2424 = vmatpush1.msra.mxu0 0.0
        %2425 = vmatprep.subr.mxu0 0.0
        %2426 = vmatpush1.msra.mxu0 0.0
        %2427 = vmatprep.subr.mxu0 0.0
        %2428 = vmatpush1.msra.mxu0 0.0
        %2429 = vmatprep.subr.mxu0 0.0
        %2430 = vmatpush1.msra.mxu0 0.0
        %2431 = vmatprep.subr.mxu0 0.0
        %2432 = vmatpush1.msra.mxu0 0.0
        %2433 = vmatprep.subr.mxu0 0.0
        %2434 = vmatpush1.msra.mxu0 0.0
        %2435 = vmatprep.subr.mxu0 0.0
        %2436 = vmatpush1.msra.mxu0 0.0
        %2437 = vmatprep.mubr.f32.mxu0 0.0
        %v2438 = vand.u32 %v162, 4294901760
        %v2439 = vsub.f32 %v162, %v2438
        %2440 = vmatmul.mubr.f32.gmra.mrb[0].mxu0 %v2439
        %v2441 = vpop.f32.mrb[0].mxu0
        %v2442 = vadd.f32 %v2305, %v2441
        %v2443 = vpop.f32.mrb[0].mxu0
        %v2444 = vadd.f32 %v2307, %v2443
        %2445 = vdwg.mxu0
        %v2446 = vand.u32 %v168, 4294901760
        %2447 = vmatprep.subr.mxu0 %v2446
        %v2448 = vand.u32 %v167, 4294901760
        %2449 = vmatpush1.msra.mxu0 %v2448
        %v2450 = vand.u32 %v174, 4294901760
        %2451 = vmatprep.subr.mxu0 %v2450
        %v2452 = vand.u32 %v173, 4294901760
        %2453 = vmatpush1.msra.mxu0 %v2452
        %v2454 = vand.u32 %v180, 4294901760
        %2455 = vmatprep.subr.mxu0 %v2454
        %v2456 = vand.u32 %v179, 4294901760
        %2457 = vmatpush1.msra.mxu0 %v2456
        %v2458 = vand.u32 %v186, 4294901760
        %2459 = vmatprep.subr.mxu0 %v2458
        %v2460 = vand.u32 %v185, 4294901760
        %2461 = vmatpush1.msra.mxu0 %v2460
        %v2462 = vand.u32 %v192, 4294901760
        %2463 = vmatprep.subr.mxu0 %v2462
        %v2464 = vand.u32 %v191, 4294901760
        %2465 = vmatpush1.msra.mxu0 %v2464
        %v2466 = vand.u32 %v198, 4294901760
        %2467 = vmatprep.subr.mxu0 %v2466
        %v2468 = vand.u32 %v197, 4294901760
        %2469 = vmatpush1.msra.mxu0 %v2468
        %v2470 = vand.u32 %v204, 4294901760
        %2471 = vmatprep.subr.mxu0 %v2470
        %v2472 = vand.u32 %v203, 4294901760
        %2473 = vmatpush1.msra.mxu0 %v2472
        %v2474 = vand.u32 %v210, 4294901760
        %2475 = vmatprep.subr.mxu0 %v2474
        %v2476 = vand.u32 %v209, 4294901760
        %2477 = vmatpush1.msra.mxu0 %v2476
        %v2478 = vand.u32 %v216, 4294901760
        %2479 = vmatprep.subr.mxu0 %v2478
        %v2480 = vand.u32 %v215, 4294901760
        %2481 = vmatpush1.msra.mxu0 %v2480
        %v2482 = vand.u32 %v222, 4294901760
        %2483 = vmatprep.subr.mxu0 %v2482
        %v2484 = vand.u32 %v221, 4294901760
        %2485 = vmatpush1.msra.mxu0 %v2484
        %v2486 = vand.u32 %v228, 4294901760
        %2487 = vmatprep.subr.mxu0 %v2486
        %v2488 = vand.u32 %v227, 4294901760
        %2489 = vmatpush1.msra.mxu0 %v2488
        %v2490 = vand.u32 %v234, 4294901760
        %2491 = vmatprep.subr.mxu0 %v2490
        %v2492 = vand.u32 %v233, 4294901760
        %2493 = vmatpush1.msra.mxu0 %v2492
        %v2494 = vand.u32 %v240, 4294901760
        %2495 = vmatprep.subr.mxu0 %v2494
        %v2496 = vand.u32 %v239, 4294901760
        %2497 = vmatpush1.msra.mxu0 %v2496
        %v2498 = vand.u32 %v246, 4294901760
        %2499 = vmatprep.subr.mxu0 %v2498
        %v2500 = vand.u32 %v245, 4294901760
        %2501 = vmatpush1.msra.mxu0 %v2500
        %v2502 = vand.u32 %v252, 4294901760
        %2503 = vmatprep.subr.mxu0 %v2502
        %v2504 = vand.u32 %v251, 4294901760
        %2505 = vmatpush1.msra.mxu0 %v2504
        %v2506 = vand.u32 %v258, 4294901760
        %2507 = vmatprep.subr.mxu0 %v2506
        %v2508 = vand.u32 %v257, 4294901760
        %2509 = vmatpush1.msra.mxu0 %v2508
        %2510 = vmatprep.subr.mxu0 0.0
        %2511 = vmatpush1.msra.mxu0 0.0
        %2512 = vmatprep.subr.mxu0 0.0
        %2513 = vmatpush1.msra.mxu0 0.0
        %2514 = vmatprep.subr.mxu0 0.0
        %2515 = vmatpush1.msra.mxu0 0.0
        %2516 = vmatprep.subr.mxu0 0.0
        %2517 = vmatpush1.msra.mxu0 0.0
        %2518 = vmatprep.subr.mxu0 0.0
        %2519 = vmatpush1.msra.mxu0 0.0
        %2520 = vmatprep.subr.mxu0 0.0
        %2521 = vmatpush1.msra.mxu0 0.0
        %2522 = vmatprep.subr.mxu0 0.0
        %2523 = vmatpush1.msra.mxu0 0.0
        %2524 = vmatprep.subr.mxu0 0.0
        %2525 = vmatpush1.msra.mxu0 0.0
        %2526 = vmatprep.subr.mxu0 0.0
        %2527 = vmatpush1.msra.mxu0 0.0
        %2528 = vmatprep.subr.mxu0 0.0
        %2529 = vmatpush1.msra.mxu0 0.0
        %2530 = vmatprep.subr.mxu0 0.0
        %2531 = vmatpush1.msra.mxu0 0.0
        %2532 = vmatprep.subr.mxu0 0.0
        %2533 = vmatpush1.msra.mxu0 0.0
        %2534 = vmatprep.subr.mxu0 0.0
        %2535 = vmatpush1.msra.mxu0 0.0
        %2536 = vmatprep.subr.mxu0 0.0
        %2537 = vmatpush1.msra.mxu0 0.0
        %2538 = vmatprep.subr.mxu0 0.0
        %2539 = vmatpush1.msra.mxu0 0.0
        %2540 = vmatprep.subr.mxu0 0.0
        %2541 = vmatpush1.msra.mxu0 0.0
        %2542 = vmatprep.mubr.f32.mxu0 0.0
        %v2543 = vand.u32 %v162, 4294901760
        %v2544 = vsub.f32 %v162, %v2543
        %v2545 = vand.u32 %v2544, 4294901760
        %2546 = vmatmul.mubr.f32.gmra.mrb[0].mxu0 %v2545
        %v2547 = vpop.f32.mrb[0].mxu0
        %v2548 = vadd.f32 %v2442, %v2547
        %v2549 = vpop.f32.mrb[0].mxu0
        %v2550 = vadd.f32 %v2444, %v2549
        %2551 = vdwg.mxu0
        %v2552 = vand.u32 %v168, 4294901760
        %v2553 = vsub.f32 %v168, %v2552
        %v2554 = vand.u32 %v2553, 4294901760
        %2555 = vmatprep.subr.mxu0 %v2554
        %v2556 = vand.u32 %v167, 4294901760
        %v2557 = vsub.f32 %v167, %v2556
        %v2558 = vand.u32 %v2557, 4294901760
        %2559 = vmatpush1.msra.mxu0 %v2558
        %v2560 = vand.u32 %v174, 4294901760
        %v2561 = vsub.f32 %v174, %v2560
        %v2562 = vand.u32 %v2561, 4294901760
        %2563 = vmatprep.subr.mxu0 %v2562
        %v2564 = vand.u32 %v173, 4294901760
        %v2565 = vsub.f32 %v173, %v2564
        %v2566 = vand.u32 %v2565, 4294901760
        %2567 = vmatpush1.msra.mxu0 %v2566
        %v2568 = vand.u32 %v180, 4294901760
        %v2569 = vsub.f32 %v180, %v2568
        %v2570 = vand.u32 %v2569, 4294901760
        %2571 = vmatprep.subr.mxu0 %v2570
        %v2572 = vand.u32 %v179, 4294901760
        %v2573 = vsub.f32 %v179, %v2572
        %v2574 = vand.u32 %v2573, 4294901760
        %2575 = vmatpush1.msra.mxu0 %v2574
        %v2576 = vand.u32 %v186, 4294901760
        %v2577 = vsub.f32 %v186, %v2576
        %v2578 = vand.u32 %v2577, 4294901760
        %2579 = vmatprep.subr.mxu0 %v2578
        %v2580 = vand.u32 %v185, 4294901760
        %v2581 = vsub.f32 %v185, %v2580
        %v2582 = vand.u32 %v2581, 4294901760
        %2583 = vmatpush1.msra.mxu0 %v2582
        %v2584 = vand.u32 %v192, 4294901760
        %v2585 = vsub.f32 %v192, %v2584
        %v2586 = vand.u32 %v2585, 4294901760
        %2587 = vmatprep.subr.mxu0 %v2586
        %v2588 = vand.u32 %v191, 4294901760
        %v2589 = vsub.f32 %v191, %v2588
        %v2590 = vand.u32 %v2589, 4294901760
        %2591 = vmatpush1.msra.mxu0 %v2590
        %v2592 = vand.u32 %v198, 4294901760
        %v2593 = vsub.f32 %v198, %v2592
        %v2594 = vand.u32 %v2593, 4294901760
        %2595 = vmatprep.subr.mxu0 %v2594
        %v2596 = vand.u32 %v197, 4294901760
        %v2597 = vsub.f32 %v197, %v2596
        %v2598 = vand.u32 %v2597, 4294901760
        %2599 = vmatpush1.msra.mxu0 %v2598
        %v2600 = vand.u32 %v204, 4294901760
        %v2601 = vsub.f32 %v204, %v2600
        %v2602 = vand.u32 %v2601, 4294901760
        %2603 = vmatprep.subr.mxu0 %v2602
        %v2604 = vand.u32 %v203, 4294901760
        %v2605 = vsub.f32 %v203, %v2604
        %v2606 = vand.u32 %v2605, 4294901760
        %2607 = vmatpush1.msra.mxu0 %v2606
        %v2608 = vand.u32 %v210, 4294901760
        %v2609 = vsub.f32 %v210, %v2608
        %v2610 = vand.u32 %v2609, 4294901760
        %2611 = vmatprep.subr.mxu0 %v2610
        %v2612 = vand.u32 %v209, 4294901760
        %v2613 = vsub.f32 %v209, %v2612
        %v2614 = vand.u32 %v2613, 4294901760
        %2615 = vmatpush1.msra.mxu0 %v2614
        %v2616 = vand.u32 %v216, 4294901760
        %v2617 = vsub.f32 %v216, %v2616
        %v2618 = vand.u32 %v2617, 4294901760
        %2619 = vmatprep.subr.mxu0 %v2618
        %v2620 = vand.u32 %v215, 4294901760
        %v2621 = vsub.f32 %v215, %v2620
        %v2622 = vand.u32 %v2621, 4294901760
        %2623 = vmatpush1.msra.mxu0 %v2622
        %v2624 = vand.u32 %v222, 4294901760
        %v2625 = vsub.f32 %v222, %v2624
        %v2626 = vand.u32 %v2625, 4294901760
        %2627 = vmatprep.subr.mxu0 %v2626
        %v2628 = vand.u32 %v221, 4294901760
        %v2629 = vsub.f32 %v221, %v2628
        %v2630 = vand.u32 %v2629, 4294901760
        %2631 = vmatpush1.msra.mxu0 %v2630
        %v2632 = vand.u32 %v228, 4294901760
        %v2633 = vsub.f32 %v228, %v2632
        %v2634 = vand.u32 %v2633, 4294901760
        %2635 = vmatprep.subr.mxu0 %v2634
        %v2636 = vand.u32 %v227, 4294901760
        %v2637 = vsub.f32 %v227, %v2636
        %v2638 = vand.u32 %v2637, 4294901760
        %2639 = vmatpush1.msra.mxu0 %v2638
        %v2640 = vand.u32 %v234, 4294901760
        %v2641 = vsub.f32 %v234, %v2640
        %v2642 = vand.u32 %v2641, 4294901760
        %2643 = vmatprep.subr.mxu0 %v2642
        %v2644 = vand.u32 %v233, 4294901760
        %v2645 = vsub.f32 %v233, %v2644
        %v2646 = vand.u32 %v2645, 4294901760
        %2647 = vmatpush1.msra.mxu0 %v2646
        %v2648 = vand.u32 %v240, 4294901760
        %v2649 = vsub.f32 %v240, %v2648
        %v2650 = vand.u32 %v2649, 4294901760
        %2651 = vmatprep.subr.mxu0 %v2650
        %v2652 = vand.u32 %v239, 4294901760
        %v2653 = vsub.f32 %v239, %v2652
        %v2654 = vand.u32 %v2653, 4294901760
        %2655 = vmatpush1.msra.mxu0 %v2654
        %v2656 = vand.u32 %v246, 4294901760
        %v2657 = vsub.f32 %v246, %v2656
        %v2658 = vand.u32 %v2657, 4294901760
        %2659 = vmatprep.subr.mxu0 %v2658
        %v2660 = vand.u32 %v245, 4294901760
        %v2661 = vsub.f32 %v245, %v2660
        %v2662 = vand.u32 %v2661, 4294901760
        %2663 = vmatpush1.msra.mxu0 %v2662
        %v2664 = vand.u32 %v252, 4294901760
        %v2665 = vsub.f32 %v252, %v2664
        %v2666 = vand.u32 %v2665, 4294901760
        %2667 = vmatprep.subr.mxu0 %v2666
        %v2668 = vand.u32 %v251, 4294901760
        %v2669 = vsub.f32 %v251, %v2668
        %v2670 = vand.u32 %v2669, 4294901760
        %2671 = vmatpush1.msra.mxu0 %v2670
        %v2672 = vand.u32 %v258, 4294901760
        %v2673 = vsub.f32 %v258, %v2672
        %v2674 = vand.u32 %v2673, 4294901760
        %2675 = vmatprep.subr.mxu0 %v2674
        %v2676 = vand.u32 %v257, 4294901760
        %v2677 = vsub.f32 %v257, %v2676
        %v2678 = vand.u32 %v2677, 4294901760
        %2679 = vmatpush1.msra.mxu0 %v2678
        %2680 = vmatprep.subr.mxu0 0.0
        %2681 = vmatpush1.msra.mxu0 0.0
        %2682 = vmatprep.subr.mxu0 0.0
        %2683 = vmatpush1.msra.mxu0 0.0
        %2684 = vmatprep.subr.mxu0 0.0
        %2685 = vmatpush1.msra.mxu0 0.0
        %2686 = vmatprep.subr.mxu0 0.0
        %2687 = vmatpush1.msra.mxu0 0.0
        %2688 = vmatprep.subr.mxu0 0.0
        %2689 = vmatpush1.msra.mxu0 0.0
        %2690 = vmatprep.subr.mxu0 0.0
        %2691 = vmatpush1.msra.mxu0 0.0
        %2692 = vmatprep.subr.mxu0 0.0
        %2693 = vmatpush1.msra.mxu0 0.0
        %2694 = vmatprep.subr.mxu0 0.0
        %2695 = vmatpush1.msra.mxu0 0.0
        %2696 = vmatprep.subr.mxu0 0.0
        %2697 = vmatpush1.msra.mxu0 0.0
        %2698 = vmatprep.subr.mxu0 0.0
        %2699 = vmatpush1.msra.mxu0 0.0
        %2700 = vmatprep.subr.mxu0 0.0
        %2701 = vmatpush1.msra.mxu0 0.0
        %2702 = vmatprep.subr.mxu0 0.0
        %2703 = vmatpush1.msra.mxu0 0.0
        %2704 = vmatprep.subr.mxu0 0.0
        %2705 = vmatpush1.msra.mxu0 0.0
        %2706 = vmatprep.subr.mxu0 0.0
        %2707 = vmatpush1.msra.mxu0 0.0
        %2708 = vmatprep.subr.mxu0 0.0
        %2709 = vmatpush1.msra.mxu0 0.0
        %2710 = vmatprep.subr.mxu0 0.0
        %2711 = vmatpush1.msra.mxu0 0.0
        %2712 = vmatprep.mubr.f32.mxu0 0.0
        %v2713 = vand.u32 %v162, 4294901760
        %2714 = vmatmul.mubr.f32.gmra.mrb[0].mxu0 %v2713
        %v2715 = vpop.f32.mrb[0].mxu0
        %v2716 = vadd.f32 %v2548, %v2715
        %v2717 = vpop.f32.mrb[0].mxu0
        %v2718 = vadd.f32 %v2550, %v2717
        %2719 = vdwg.mxu0
        %v2720 = vand.u32 %v168, 4294901760
        %2721 = vmatprep.subr.mxu0 %v2720
        %v2722 = vand.u32 %v167, 4294901760
        %2723 = vmatpush1.msra.mxu0 %v2722
        %v2724 = vand.u32 %v174, 4294901760
        %2725 = vmatprep.subr.mxu0 %v2724
        %v2726 = vand.u32 %v173, 4294901760
        %2727 = vmatpush1.msra.mxu0 %v2726
        %v2728 = vand.u32 %v180, 4294901760
        %2729 = vmatprep.subr.mxu0 %v2728
        %v2730 = vand.u32 %v179, 4294901760
        %2731 = vmatpush1.msra.mxu0 %v2730
        %v2732 = vand.u32 %v186, 4294901760
        %2733 = vmatprep.subr.mxu0 %v2732
        %v2734 = vand.u32 %v185, 4294901760
        %2735 = vmatpush1.msra.mxu0 %v2734
        %v2736 = vand.u32 %v192, 4294901760
        %2737 = vmatprep.subr.mxu0 %v2736
        %v2738 = vand.u32 %v191, 4294901760
        %2739 = vmatpush1.msra.mxu0 %v2738
        %v2740 = vand.u32 %v198, 4294901760
        %2741 = vmatprep.subr.mxu0 %v2740
        %v2742 = vand.u32 %v197, 4294901760
        %2743 = vmatpush1.msra.mxu0 %v2742
        %v2744 = vand.u32 %v204, 4294901760
        %2745 = vmatprep.subr.mxu0 %v2744
        %v2746 = vand.u32 %v203, 4294901760
        %2747 = vmatpush1.msra.mxu0 %v2746
        %v2748 = vand.u32 %v210, 4294901760
        %2749 = vmatprep.subr.mxu0 %v2748
        %v2750 = vand.u32 %v209, 4294901760
        %2751 = vmatpush1.msra.mxu0 %v2750
        %v2752 = vand.u32 %v216, 4294901760
        %2753 = vmatprep.subr.mxu0 %v2752
        %v2754 = vand.u32 %v215, 4294901760
        %2755 = vmatpush1.msra.mxu0 %v2754
        %v2756 = vand.u32 %v222, 4294901760
        %2757 = vmatprep.subr.mxu0 %v2756
        %v2758 = vand.u32 %v221, 4294901760
        %2759 = vmatpush1.msra.mxu0 %v2758
        %v2760 = vand.u32 %v228, 4294901760
        %2761 = vmatprep.subr.mxu0 %v2760
        %v2762 = vand.u32 %v227, 4294901760
        %2763 = vmatpush1.msra.mxu0 %v2762
        %v2764 = vand.u32 %v234, 4294901760
        %2765 = vmatprep.subr.mxu0 %v2764
        %v2766 = vand.u32 %v233, 4294901760
        %2767 = vmatpush1.msra.mxu0 %v2766
        %v2768 = vand.u32 %v240, 4294901760
        %2769 = vmatprep.subr.mxu0 %v2768
        %v2770 = vand.u32 %v239, 4294901760
        %2771 = vmatpush1.msra.mxu0 %v2770
        %v2772 = vand.u32 %v246, 4294901760
        %2773 = vmatprep.subr.mxu0 %v2772
        %v2774 = vand.u32 %v245, 4294901760
        %2775 = vmatpush1.msra.mxu0 %v2774
        %v2776 = vand.u32 %v252, 4294901760
        %2777 = vmatprep.subr.mxu0 %v2776
        %v2778 = vand.u32 %v251, 4294901760
        %2779 = vmatpush1.msra.mxu0 %v2778
        %v2780 = vand.u32 %v258, 4294901760
        %2781 = vmatprep.subr.mxu0 %v2780
        %v2782 = vand.u32 %v257, 4294901760
        %2783 = vmatpush1.msra.mxu0 %v2782
        %2784 = vmatprep.subr.mxu0 0.0
        %2785 = vmatpush1.msra.mxu0 0.0
        %2786 = vmatprep.subr.mxu0 0.0
        %2787 = vmatpush1.msra.mxu0 0.0
        %2788 = vmatprep.subr.mxu0 0.0
        %2789 = vmatpush1.msra.mxu0 0.0
        %2790 = vmatprep.subr.mxu0 0.0
        %2791 = vmatpush1.msra.mxu0 0.0
        %2792 = vmatprep.subr.mxu0 0.0
        %2793 = vmatpush1.msra.mxu0 0.0
        %2794 = vmatprep.subr.mxu0 0.0
        %2795 = vmatpush1.msra.mxu0 0.0
        %2796 = vmatprep.subr.mxu0 0.0
        %2797 = vmatpush1.msra.mxu0 0.0
        %2798 = vmatprep.subr.mxu0 0.0
        %2799 = vmatpush1.msra.mxu0 0.0
        %2800 = vmatprep.subr.mxu0 0.0
        %2801 = vmatpush1.msra.mxu0 0.0
        %2802 = vmatprep.subr.mxu0 0.0
        %2803 = vmatpush1.msra.mxu0 0.0
        %2804 = vmatprep.subr.mxu0 0.0
        %2805 = vmatpush1.msra.mxu0 0.0
        %2806 = vmatprep.subr.mxu0 0.0
        %2807 = vmatpush1.msra.mxu0 0.0
        %2808 = vmatprep.subr.mxu0 0.0
        %2809 = vmatpush1.msra.mxu0 0.0
        %2810 = vmatprep.subr.mxu0 0.0
        %2811 = vmatpush1.msra.mxu0 0.0
        %2812 = vmatprep.subr.mxu0 0.0
        %2813 = vmatpush1.msra.mxu0 0.0
        %2814 = vmatprep.subr.mxu0 0.0
        %2815 = vmatpush1.msra.mxu0 0.0
        %2816 = vmatprep.mubr.f32.mxu0 0.0
        %v2817 = vand.u32 %v162, 4294901760
        %2818 = vmatmul.mubr.f32.gmra.mrb[0].mxu0 %v2817
        %v2819 = vpop.f32.mrb[0].mxu0
        %v2820 = vadd.f32 %v2716, %v2819
        %v2821 = vpop.f32.mrb[0].mxu0
        %v2822 = vadd.f32 %v2718, %v2821
        %2823 = vdwg.mxu0
        %2824 = vst [vmem:[%s149] sm:$0xff] %v1110
        %2825 = vst [vmem:[%s149 + $0x8] sm:$0xff] %v1112
        %2826 = vst [vmem:[%s149 + $0x10] sm:$0xff] %v1965
        %2827 = vst [vmem:[%s149 + $0x18] sm:$0xff] %v1967
        %2828 = vst [vmem:[%s149 + $0x20] sm:$0xff] %v2820
        %2829 = vst [vmem:[%s149 + $0x28] sm:$0xff] %v2822
        %s2830 = sand.u32 %s72, 1
        %s2831 = scalar_lea.sflag [#allocation4], %s2830
        %s2832 = sand.u32 %s72, 1
        %s2833 = smul.addr %s2832, 48
        %s2834 = scalar_lea.vmem [#allocation5], %s2833
        // Predicated region
        $region33: #{tpu_custom_call.1} parent=27 // pred_check
          %p2835 = pneg %p82
        $region34: #{tpu_custom_call.1} parent=27 // pred_check_branch
          %2837 = sbr.rel (%p2835) target = $region36
        $region35: #{tpu_custom_call.1} parent=27 // pred_region
          %s2839 = ssub.s32 768, 768
          %2840 = vsyncadd %s2831, %s2839
          %s2841 = smul.addr %s17, 6
          %s2842 = smul.addr %s2841, 128
          %s2843 = scalar_lea.hbm %s2, %s2842
          %s2845 = sshll.u32 %s2834, 4
          %s2846 = int_to_ptr.vmem [resolvable:$true] %s2845
          %2848 = dma.vmem_to_hbm [thread:$0]  %s2846, 768, %s2843, %s2831
        $region36: #{tpu_custom_call.1} parent=27 // pred_fallthru
          _
      $region28: #{tpu_custom_call.1} parent=5 // pred_fallthru
        _
      %p2849 = scmp.le.s32.totalorder 2, %s12
      // Predicated region
      $region37: #{tpu_custom_call.1} parent=5 // pred_check
        %p2850 = pneg %p2849
      $region38: #{tpu_custom_call.1} parent=5 // pred_check_branch
        %2852 = sbr.rel (%p2850) target = $region40
      $region39: #{tpu_custom_call.1} parent=5 // pred_region
        %s2853 = ssub.s32 %s12, 2
        // Predicated region
        $region41: #{tpu_custom_call.1} parent=39 // pred_check
          %p2854 = pneg %p88
        $region42: #{tpu_custom_call.1} parent=39 // pred_check_branch
          %2856 = sbr.rel (%p2854) target = $region44
        $region43: #{tpu_custom_call.1} parent=39 // pred_region
          %s2857 = sand.u32 %s73, 1
          %s2858 = scalar_lea.sflag [#allocation4], %s2857
          %s2859 = sand.u32 %s73, 1
          %s2860 = smul.addr %s2859, 48
          %s2861 = scalar_lea.vmem [#allocation5], %s2860
          %2862 = dma.done %s2858, 768
        $region44: #{tpu_custom_call.1} parent=39 // pred_fallthru
          _
      $region40: #{tpu_custom_call.1} parent=5 // pred_fallthru
        _
    $region6: #{tpu_custom_call.1} parent=1 // loop_footer
      %s16 = sadd.s32 1, %s12
    $region7: #{tpu_custom_call.1} parent=1 // loop_footer_branch
      %11 = sbr.rel target = $region3
    $region8: #{tpu_custom_call.1} parent=1 // loop_exit
      _
    %2863 = vsyncpa [#allocation3], 1
    %s2864 = scalar_lea.sflag [#allocation3], 1
    %2865 = vsyncpa %s2864, 1
    %2866 = vsyncpa [#allocation4], 1
    %s2867 = scalar_lea.sflag [#allocation4], 1
    %2868 = vsyncpa %s2867, 1

</llo_original>
